<compile_context>
chip_gen: v6e
topology: v6e:2x2x1
jax: 0.10.0
libtpu: 0.0.40
codegen_flags: <defaults>
</compile_context>

<pallas_src>
import jax
import jax.numpy as jnp
from jax.experimental import pallas as pl
from jax.experimental.pallas import tpu as pltpu


def _round_up(x, m):
    return ((x + m - 1) // m) * m


def _make_cnn_kernel(TILE_N, Lp, Nc, Dp, Kmax, C3Pad):
    R = TILE_N * Lp  # flattened (batch*time) rows per tile

    def kernel(idx_ref, emb_ref, wf_ref, bf_ref, thr_ref,
               fc1w_ref, fc1b_ref, fc2w_ref, fc2b_ref,
               logits_ref, reps_ref):
        # ---- embedding lookup as a one-hot matmul on the MXU --------------
        idx = idx_ref[...]                                             # (TILE_N, Lp) int32
        cls = jax.lax.broadcasted_iota(jnp.int32, (TILE_N, Lp, Nc), 2)
        onehot = (idx[:, :, None] == cls).astype(jnp.float32).reshape(R, Nc)
        e = jnp.dot(onehot, emb_ref[...],
                    preferred_element_type=jnp.float32)                # (R, Dp)

        # ---- fused conv over all branches: Kmax accumulated matmuls -------
        # pltpu.roll(e, R - k) gives e_k[r] == e[(r + k) % R].  Rows that wrap
        # from the next batch row (or the tile start) only land on time
        # positions t > L - K, which the validity mask below zeroes out.
        acc = jnp.dot(e, wf_ref[0], preferred_element_type=jnp.float32)  # (R, C3Pad)
        for k in range(1, Kmax):
            e_k = pltpu.roll(e, shift=R - k, axis=0)
            acc = acc + jnp.dot(e_k, wf_ref[k],
                                preferred_element_type=jnp.float32)

        # ReLU BEFORE masking: masked positions become exactly 0 and the ReLU
        # output is >= 0, so a masked 0 can never win the max-pool.  If the
        # activation ever changes to one that can be negative, switch the mask
        # to a -inf fill instead of multiply-by-0.
        conv = jnp.maximum(acc + bf_ref[...], 0.0)                     # (R, C3Pad)
        conv3 = conv.reshape(TILE_N, Lp, C3Pad)

        # in-kernel validity mask: position t is valid for a channel iff
        # t <= thr (thr = L - K for real channels, -1 for lane-pad channels).
        t_pos = jax.lax.broadcasted_iota(jnp.int32, (Lp, C3Pad), 0)
        valid = (t_pos <= thr_ref[...]).astype(jnp.float32)            # (Lp, C3Pad)

        # ---- max-pool over time: one segmented reduction -------------------
        pooled = jnp.max(conv3 * valid, axis=1)                        # (TILE_N, C3Pad)

        # ---- dropout = identity; fc1 -> ReLU -> reps; fc2 -> logits --------
        h = jnp.maximum(
            jnp.dot(pooled, fc1w_ref[...],
                    preferred_element_type=jnp.float32) + fc1b_ref[...], 0.0)
        reps_ref[...] = h                                              # (TILE_N, RepPad)
        logits_ref[...] = (jnp.dot(h, fc2w_ref[...],
                                   preferred_element_type=jnp.float32)
                           + fc2b_ref[...])                            # (TILE_N, OutPad)

    return kernel


def cnn_forward(x_idx, params, Ks, tile_n=128):
    """x_idx: (B0, B1, L) int32. Returns (logits (B0, B1), reps (B0, B1, Rep))."""
    B0, B1, L = x_idx.shape
    N = B0 * B1
    emb_table = params["embedding"].astype(jnp.float32)               # (Nc, D)
    Nc, D = emb_table.shape
    Co = params["conv_w"][0].shape[2]
    n_conv = len(Ks)
    C3 = n_conv * Co
    Rep = params["fc1_w"].shape[1]
    Out = params["fc2_w"].shape[1]
    Kmax = max(Ks)
    assert Out == 1, "torch forward does x.view(B0, B1): requires output_dim == 1"

    # ---- batch tiling: multiple of 8 sublanes, keep >=2 grid steps when the
    # batch allows it so the "parallel" axis can shard over v7x's two TCs.
    Np8 = _round_up(N, 8)
    TILE_N = max(8, (min(tile_n, Np8) // 8) * 8)
    if Np8 // TILE_N < 2 and Np8 >= 16:
        TILE_N = max(8, ((Np8 // 2) // 8) * 8)
    Np = _round_up(N, TILE_N)
    G = Np // TILE_N

    # Time axis padded so every conv window stays inside its own row and the
    # pooling reshape stays 8-sublane aligned.  Load-bearing invariant:
    Lp = _round_up(L + Kmax - 1, 8)
    assert Lp >= L + Kmax - 1

    Dp = _round_up(D, 8)              # keep per-k weight slabs sublane-aligned
    C3Pad = _round_up(C3, 128)        # lane-dense conv/pool/fc1-input width
    RepPad = _round_up(Rep, 128)
    OutPad = _round_up(Out, 128)

    # ---- inputs: indices (padded rows / padded time use index 0) ----------
    idx = x_idx.reshape(N, L).astype(jnp.int32)
    idx = jnp.pad(idx, ((0, Np - N), (0, Lp - L)))                    # (Np, Lp)

    # ---- embedding table, zero-padded to Dp columns ------------------------
    emb = jnp.pad(emb_table, ((0, 0), (0, Dp - D)))                   # (Nc, Dp)

    # ---- fused conv weights: (Kmax, Dp, C3Pad); each branch's kernel is
    # zero-padded to Kmax taps and occupies its own Co-wide column slab.
    wf = jnp.zeros((Kmax, Dp, C3Pad), jnp.float32)
    bf = jnp.zeros((1, C3Pad), jnp.float32)
    thr = jnp.full((1, C3Pad), -1, jnp.int32)   # -1 => lane-pad channel, always masked
    for i, (w, b, K) in enumerate(zip(params["conv_w"], params["conv_b"], Ks)):
        w = w.astype(jnp.float32)                                     # (K, D, Co)
        wf = wf.at[:K, :D, i * Co:(i + 1) * Co].set(w)
        bf = bf.at[0, i * Co:(i + 1) * Co].set(b.astype(jnp.float32).reshape(Co))
        thr = thr.at[0, i * Co:(i + 1) * Co].set(L - K)

    # ---- fc weights, zero-padded to lane-dense widths ----------------------
    fc1w = jnp.pad(params["fc1_w"].astype(jnp.float32),
                   ((0, C3Pad - C3), (0, RepPad - Rep)))              # (C3Pad, RepPad)
    fc1b = jnp.pad(params["fc1_b"].astype(jnp.float32).reshape(1, Rep),
                   ((0, 0), (0, RepPad - Rep)))                       # (1, RepPad)
    fc2w = jnp.pad(params["fc2_w"].astype(jnp.float32),
                   ((0, RepPad - Rep), (0, OutPad - Out)))            # (RepPad, OutPad)
    fc2b = jnp.pad(params["fc2_b"].astype(jnp.float32).reshape(1, Out),
                   ((0, 0), (0, OutPad - Out)))                       # (1, OutPad)

    def bcast(shape):
        zeros = (0,) * len(shape)
        return pl.BlockSpec(shape, lambda g, _z=zeros: _z)

    in_specs = [
        pl.BlockSpec((TILE_N, Lp), lambda g: (g, 0)),   # idx (blocked over batch tiles)
        bcast((Nc, Dp)),                                # embedding table
        bcast((Kmax, Dp, C3Pad)), bcast((1, C3Pad)),    # fused conv weight / bias
        bcast((1, C3Pad)),                              # per-channel max-valid-t
        bcast((C3Pad, RepPad)), bcast((1, RepPad)),     # fc1
        bcast((RepPad, OutPad)), bcast((1, OutPad)),    # fc2
    ]
    out_specs = (pl.BlockSpec((TILE_N, OutPad), lambda g: (g, 0)),
                 pl.BlockSpec((TILE_N, RepPad), lambda g: (g, 0)))
    out_shape = (jax.ShapeDtypeStruct((Np, OutPad), jnp.float32),
                 jax.ShapeDtypeStruct((Np, RepPad), jnp.float32))

    kernel = _make_cnn_kernel(TILE_N, Lp, Nc, Dp, Kmax, C3Pad)

    # NOTE: constant-index broadcast weights could use pipeline_mode=pl.Buffered(1)
    # to save their second VMEM buffer on v7x; unnecessary at these sizes.
    logits_pad, reps_pad = pl.pallas_call(
        kernel,
        grid=(G,),
        in_specs=in_specs,
        out_specs=out_specs,
        out_shape=out_shape,
        compiler_params=pltpu.CompilerParams(dimension_semantics=("parallel",)),
    )(idx, emb, wf, bf, thr, fc1w, fc1b, fc2w, fc2b)

    # matches torch: x.view(B0, B1) (Out == 1) and reps.view(B0, B1, -1)
    logits = logits_pad[:N, :Out].reshape(B0, B1)
    reps = reps_pad[:N, :Rep].reshape(B0, B1, Rep)
    return logits, reps


def cnn_reference(x_idx, params, Ks):
    """Pure-JAX reference for correctness check."""
    B0, B1, L = x_idx.shape
    N = B0 * B1
    emb = jnp.take(params["embedding"], x_idx.reshape(N, L), axis=0)  # (N, L, D)
    pooled = []
    for w, b in zip(params["conv_w"], params["conv_b"]):
        K = w.shape[0]
        Lout = L - K + 1
        conv = jnp.zeros((N, Lout, w.shape[2]), jnp.float32)
        for k in range(K):
            conv = conv + jnp.einsum("nld,dc->nlc", emb[:, k:k + Lout, :], w[k])
        conv = jnp.maximum(conv + b[:, None, :], 0.0)
        pooled.append(jnp.max(conv, axis=1))
    feat = jnp.concatenate(pooled, axis=1)
    h = jnp.maximum(feat @ params["fc1_w"] + params["fc1_b"], 0.0)
    logits = h @ params["fc2_w"] + params["fc2_b"]
    Rep = params["fc1_w"].shape[1]
    return logits.reshape(B0, B1), h.reshape(B0, B1, Rep)


def init_params(key, Nc, D, Co, Ks, Rep, Out):
    n = len(Ks)
    keys = jax.random.split(key, 2 * n + 5)
    emb = 0.1 * jax.random.normal(keys[0], (Nc, D), jnp.float32)
    emb = emb.at[0].set(0.0)  # padding_idx=0
    conv_w = [0.1 * jax.random.normal(keys[1 + i], (K, D, Co), jnp.float32)
              for i, K in enumerate(Ks)]
    conv_b = [0.1 * jax.random.normal(keys[1 + n + i], (1, Co), jnp.float32)
              for i in range(n)]
    fc1_w = 0.1 * jax.random.normal(keys[1 + 2 * n], (n * Co, Rep), jnp.float32)
    fc1_b = 0.1 * jax.random.normal(keys[2 + 2 * n], (1, Rep), jnp.float32)
    fc2_w = 0.1 * jax.random.normal(keys[3 + 2 * n], (Rep, Out), jnp.float32)
    fc2_b = 0.1 * jax.random.normal(keys[4 + 2 * n], (1, Out), jnp.float32)
    return {"embedding": emb, "conv_w": conv_w, "conv_b": conv_b,
            "fc1_w": fc1_w, "fc1_b": fc1_b, "fc2_w": fc2_w, "fc2_b": fc2_b}


if __name__ == "__main__":
    # module hyperparams (small, consistent with the forward pass)
    Nc, D, Ci, Co = 32, 16, 1, 8
    Ks = (2, 3, 4)
    Drop, Rep, Out = 0.5, 32, 1   # Out must be 1 (torch view(B0, B1))
    B0, B1, L = 2, 4, 12

    key = jax.random.PRNGKey(0)
    k_params, k_input = jax.random.split(key)
    params = init_params(k_params, Nc, D, Co, Ks, Rep, Out)
    x = jax.random.randint(k_input, (B0, B1, L), 0, Nc, dtype=jnp.int32)

    logits, reps = cnn_forward(x, params, Ks)
    logits = jax.block_until_ready(logits)
    reps = jax.block_until_ready(reps)

    ref_logits, ref_reps = cnn_reference(x, params, Ks)
    assert logits.shape == (B0, B1) and reps.shape == (B0, B1, Rep)
    assert jnp.allclose(logits, ref_logits, atol=1e-4, rtol=1e-4)
    assert jnp.allclose(reps, ref_reps, atol=1e-4, rtol=1e-4)

    print("KERNEL_OK")
</pallas_src>

<mosaic_0001>
module attributes {stable_mosaic.version = 11 : i64} {
  func.func @kernel(%arg0: i32, %arg1: memref<8x16xi32, #tpu.memory_space<vmem>>, %arg2: memref<32x16xf32, #tpu.memory_space<vmem>>, %arg3: memref<4x16x128xf32, #tpu.memory_space<vmem>>, %arg4: memref<1x128xf32, #tpu.memory_space<vmem>>, %arg5: memref<1x128xi32, #tpu.memory_space<vmem>>, %arg6: memref<128x128xf32, #tpu.memory_space<vmem>>, %arg7: memref<1x128xf32, #tpu.memory_space<vmem>>, %arg8: memref<128x128xf32, #tpu.memory_space<vmem>>, %arg9: memref<1x128xf32, #tpu.memory_space<vmem>>, %arg10: memref<8x128xf32, #tpu.memory_space<vmem>>, %arg11: memref<8x128xf32, #tpu.memory_space<vmem>>) attributes {dimension_semantics = [#tpu.dimension_semantics<parallel>], iteration_bounds = array<i64: 1>, scalar_prefetch = 0 : i64, scratch_operands = 0 : i64, tpu.core_type = #tpu.core_type<tc>, window_params = [{transform_indices = @transform_0, window_bounds = array<i64: 8, 16>}, {pipeline_mode = #tpu.pipeline_mode<synchronous>, transform_indices = @transform_1, window_bounds = array<i64: 32, 16>}, {pipeline_mode = #tpu.pipeline_mode<synchronous>, transform_indices = @transform_2, window_bounds = array<i64: 4, 16, 128>}, {pipeline_mode = #tpu.pipeline_mode<synchronous>, transform_indices = @transform_3, window_bounds = array<i64: 1, 128>}, {pipeline_mode = #tpu.pipeline_mode<synchronous>, transform_indices = @transform_4, window_bounds = array<i64: 1, 128>}, {pipeline_mode = #tpu.pipeline_mode<synchronous>, transform_indices = @transform_5, window_bounds = array<i64: 128, 128>}, {pipeline_mode = #tpu.pipeline_mode<synchronous>, transform_indices = @transform_6, window_bounds = array<i64: 1, 128>}, {pipeline_mode = #tpu.pipeline_mode<synchronous>, transform_indices = @transform_7, window_bounds = array<i64: 128, 128>}, {pipeline_mode = #tpu.pipeline_mode<synchronous>, transform_indices = @transform_8, window_bounds = array<i64: 1, 128>}, {transform_indices = @transform_9, window_bounds = array<i64: 8, 128>}, {transform_indices = @transform_10, window_bounds = array<i64: 8, 128>}]} {
    %c0 = arith.constant 0 : index
    %c0_0 = arith.constant 0 : index
    %0 = vector.load %arg1[%c0, %c0_0] : memref<8x16xi32, #tpu.memory_space<vmem>>, vector<8x16xi32>
    %1 = tpu.iota {dimensions = array<i32: 2>} : vector<8x16x32xi32>
    %2 = vector.shape_cast %0 : vector<8x16xi32> to vector<8x16x1xi32>
    %3 = vector.broadcast %2 : vector<8x16x1xi32> to vector<8x16x32xi32>
    %4 = arith.cmpi eq, %3, %1 : vector<8x16x32xi32>
    %5 = arith.extui %4 : vector<8x16x32xi1> to vector<8x16x32xi32>
    %6 = arith.sitofp %5 : vector<8x16x32xi32> to vector<8x16x32xf32>
    %7 = vector.shape_cast %6 : vector<8x16x32xf32> to vector<128x32xf32>
    %c0_1 = arith.constant 0 : index
    %c0_2 = arith.constant 0 : index
    %8 = vector.load %arg2[%c0_1, %c0_2] : memref<32x16xf32, #tpu.memory_space<vmem>>, vector<32x16xf32>
    %cst = arith.constant dense<0.000000e+00> : vector<128x16xf32>
    %9 = tpu.matmul %7, %8, %cst {dimension_numbers = #tpu.dot_dimension_numbers<[1], [0], [0], [1], [0, 0, 1, 1], [], []>} : vector<128x32xf32>, vector<32x16xf32>, vector<128x16xf32> -> vector<128x16xf32>
    %c0_3 = arith.constant 0 : index
    %c0_4 = arith.constant 0 : index
    %c0_5 = arith.constant 0 : index
    %10 = vector.load %arg3[%c0_3, %c0_4, %c0_5] : memref<4x16x128xf32, #tpu.memory_space<vmem>>, vector<1x16x128xf32>
    %11 = vector.shape_cast %10 : vector<1x16x128xf32> to vector<16x128xf32>
    %cst_6 = arith.constant dense<0.000000e+00> : vector<128x128xf32>
    %12 = tpu.matmul %9, %11, %cst_6 {dimension_numbers = #tpu.dot_dimension_numbers<[1], [0], [0], [1], [0, 0, 1, 1], [], []>} : vector<128x16xf32>, vector<16x128xf32>, vector<128x128xf32> -> vector<128x128xf32>
    %c127_i32 = arith.constant 127 : i32
    %13 = tpu.dynamic_rotate %9 by %c127_i32 dim 0 : vector<128x16xf32>, i32 -> vector<128x16xf32>
    %c1 = arith.constant 1 : index
    %c0_7 = arith.constant 0 : index
    %c0_8 = arith.constant 0 : index
    %14 = vector.load %arg3[%c1, %c0_7, %c0_8] : memref<4x16x128xf32, #tpu.memory_space<vmem>>, vector<1x16x128xf32>
    %15 = vector.shape_cast %14 : vector<1x16x128xf32> to vector<16x128xf32>
    %cst_9 = arith.constant dense<0.000000e+00> : vector<128x128xf32>
    %16 = tpu.matmul %13, %15, %cst_9 {dimension_numbers = #tpu.dot_dimension_numbers<[1], [0], [0], [1], [0, 0, 1, 1], [], []>} : vector<128x16xf32>, vector<16x128xf32>, vector<128x128xf32> -> vector<128x128xf32>
    %17 = arith.addf %12, %16 : vector<128x128xf32>
    %c126_i32 = arith.constant 126 : i32
    %18 = tpu.dynamic_rotate %9 by %c126_i32 dim 0 : vector<128x16xf32>, i32 -> vector<128x16xf32>
    %c2 = arith.constant 2 : index
    %c0_10 = arith.constant 0 : index
    %c0_11 = arith.constant 0 : index
    %19 = vector.load %arg3[%c2, %c0_10, %c0_11] : memref<4x16x128xf32, #tpu.memory_space<vmem>>, vector<1x16x128xf32>
    %20 = vector.shape_cast %19 : vector<1x16x128xf32> to vector<16x128xf32>
    %cst_12 = arith.constant dense<0.000000e+00> : vector<128x128xf32>
    %21 = tpu.matmul %18, %20, %cst_12 {dimension_numbers = #tpu.dot_dimension_numbers<[1], [0], [0], [1], [0, 0, 1, 1], [], []>} : vector<128x16xf32>, vector<16x128xf32>, vector<128x128xf32> -> vector<128x128xf32>
    %22 = arith.addf %17, %21 : vector<128x128xf32>
    %c125_i32 = arith.constant 125 : i32
    %23 = tpu.dynamic_rotate %9 by %c125_i32 dim 0 : vector<128x16xf32>, i32 -> vector<128x16xf32>
    %c3 = arith.constant 3 : index
    %c0_13 = arith.constant 0 : index
    %c0_14 = arith.constant 0 : index
    %24 = vector.load %arg3[%c3, %c0_13, %c0_14] : memref<4x16x128xf32, #tpu.memory_space<vmem>>, vector<1x16x128xf32>
    %25 = vector.shape_cast %24 : vector<1x16x128xf32> to vector<16x128xf32>
    %cst_15 = arith.constant dense<0.000000e+00> : vector<128x128xf32>
    %26 = tpu.matmul %23, %25, %cst_15 {dimension_numbers = #tpu.dot_dimension_numbers<[1], [0], [0], [1], [0, 0, 1, 1], [], []>} : vector<128x16xf32>, vector<16x128xf32>, vector<128x128xf32> -> vector<128x128xf32>
    %27 = arith.addf %22, %26 : vector<128x128xf32>
    %c0_16 = arith.constant 0 : index
    %c0_17 = arith.constant 0 : index
    %28 = vector.load %arg4[%c0_16, %c0_17] : memref<1x128xf32, #tpu.memory_space<vmem>>, vector<1x128xf32>
    %29 = vector.broadcast %28 : vector<1x128xf32> to vector<128x128xf32>
    %30 = arith.addf %27, %29 : vector<128x128xf32>
    %cst_18 = arith.constant 0.000000e+00 : f32
    %31 = vector.broadcast %cst_18 : f32 to vector<128x128xf32>
    %32 = arith.maximumf %30, %31 : vector<128x128xf32>
    %33 = vector.shape_cast %32 : vector<128x128xf32> to vector<8x16x128xf32>
    %34 = tpu.iota {dimensions = array<i32: 0>} : vector<16x128xi32>
    %c0_19 = arith.constant 0 : index
    %c0_20 = arith.constant 0 : index
    %35 = vector.load %arg5[%c0_19, %c0_20] : memref<1x128xi32, #tpu.memory_space<vmem>>, vector<1x128xi32>
    %36 = vector.broadcast %35 : vector<1x128xi32> to vector<16x128xi32>
    %37 = arith.cmpi sle, %34, %36 : vector<16x128xi32>
    %38 = arith.extui %37 : vector<16x128xi1> to vector<16x128xi32>
    %39 = arith.sitofp %38 : vector<16x128xi32> to vector<16x128xf32>
    %40 = vector.shape_cast %39 : vector<16x128xf32> to vector<1x16x128xf32>
    %41 = vector.broadcast %40 : vector<1x16x128xf32> to vector<8x16x128xf32>
    %42 = arith.mulf %33, %41 : vector<8x16x128xf32>
    %cst_21 = arith.constant dense<0xFF800000> : vector<8x128xf32>
    %43 = vector.multi_reduction <maximumf>, %42, %cst_21 [1] : vector<8x16x128xf32> to vector<8x128xf32>
    %c0_22 = arith.constant 0 : index
    %c0_23 = arith.constant 0 : index
    %44 = vector.load %arg6[%c0_22, %c0_23] : memref<128x128xf32, #tpu.memory_space<vmem>>, vector<128x128xf32>
    %cst_24 = arith.constant dense<0.000000e+00> : vector<8x128xf32>
    %45 = tpu.matmul %43, %44, %cst_24 {dimension_numbers = #tpu.dot_dimension_numbers<[1], [0], [0], [1], [0, 0, 1, 1], [], []>} : vector<8x128xf32>, vector<128x128xf32>, vector<8x128xf32> -> vector<8x128xf32>
    %c0_25 = arith.constant 0 : index
    %c0_26 = arith.constant 0 : index
    %46 = vector.load %arg7[%c0_25, %c0_26] : memref<1x128xf32, #tpu.memory_space<vmem>>, vector<1x128xf32>
    %47 = vector.broadcast %46 : vector<1x128xf32> to vector<8x128xf32>
    %48 = arith.addf %45, %47 : vector<8x128xf32>
    %cst_27 = arith.constant 0.000000e+00 : f32
    %49 = vector.broadcast %cst_27 : f32 to vector<8x128xf32>
    %50 = arith.maximumf %48, %49 : vector<8x128xf32>
    %c0_28 = arith.constant 0 : index
    %c0_29 = arith.constant 0 : index
    %51 = vector.load %arg11[%c0_28, %c0_29] : memref<8x128xf32, #tpu.memory_space<vmem>>, vector<8x128xf32>
    tpu.vector_store %arg11[%c0_28, %c0_29], %50 {strides = array<i32>} : memref<8x128xf32, #tpu.memory_space<vmem>>, vector<8x128xf32>,
    %c0_30 = arith.constant 0 : index
    %c0_31 = arith.constant 0 : index
    %52 = vector.load %arg8[%c0_30, %c0_31] : memref<128x128xf32, #tpu.memory_space<vmem>>, vector<128x128xf32>
    %cst_32 = arith.constant dense<0.000000e+00> : vector<8x128xf32>
    %53 = tpu.matmul %50, %52, %cst_32 {dimension_numbers = #tpu.dot_dimension_numbers<[1], [0], [0], [1], [0, 0, 1, 1], [], []>} : vector<8x128xf32>, vector<128x128xf32>, vector<8x128xf32> -> vector<8x128xf32>
    %c0_33 = arith.constant 0 : index
    %c0_34 = arith.constant 0 : index
    %54 = vector.load %arg9[%c0_33, %c0_34] : memref<1x128xf32, #tpu.memory_space<vmem>>, vector<1x128xf32>
    %55 = vector.broadcast %54 : vector<1x128xf32> to vector<8x128xf32>
    %56 = arith.addf %53, %55 : vector<8x128xf32>
    %c0_35 = arith.constant 0 : index
    %c0_36 = arith.constant 0 : index
    %57 = vector.load %arg10[%c0_35, %c0_36] : memref<8x128xf32, #tpu.memory_space<vmem>>, vector<8x128xf32>
    tpu.vector_store %arg10[%c0_35, %c0_36], %56 {strides = array<i32>} : memref<8x128xf32, #tpu.memory_space<vmem>>, vector<8x128xf32>,
    return
  }
  func.func @transform_0(%arg0: i32) -> (i32, i32) {
    %c0_i32 = arith.constant 0 : i32
    %c0_i32_0 = arith.constant 0 : i32
    return %arg0, %c0_i32 : i32, i32
  }
  func.func @transform_1(%arg0: i32) -> (i32, i32) {
    %c0_i32 = arith.constant 0 : i32
    %c0_i32_0 = arith.constant 0 : i32
    %c0_i32_1 = arith.constant 0 : i32
    return %c0_i32, %c0_i32_0 : i32, i32
  }
  func.func @transform_2(%arg0: i32) -> (i32, i32, i32) {
    %c0_i32 = arith.constant 0 : i32
    %c0_i32_0 = arith.constant 0 : i32
    %c0_i32_1 = arith.constant 0 : i32
    %c0_i32_2 = arith.constant 0 : i32
    return %c0_i32, %c0_i32_0, %c0_i32_1 : i32, i32, i32
  }
  func.func @transform_3(%arg0: i32) -> (i32, i32) {
    %c0_i32 = arith.constant 0 : i32
    %c0_i32_0 = arith.constant 0 : i32
    %c0_i32_1 = arith.constant 0 : i32
    return %c0_i32, %c0_i32_0 : i32, i32
  }
  func.func @transform_4(%arg0: i32) -> (i32, i32) {
    %c0_i32 = arith.constant 0 : i32
    %c0_i32_0 = arith.constant 0 : i32
    %c0_i32_1 = arith.constant 0 : i32
    return %c0_i32, %c0_i32_0 : i32, i32
  }
  func.func @transform_5(%arg0: i32) -> (i32, i32) {
    %c0_i32 = arith.constant 0 : i32
    %c0_i32_0 = arith.constant 0 : i32
    %c0_i32_1 = arith.constant 0 : i32
    return %c0_i32, %c0_i32_0 : i32, i32
  }
  func.func @transform_6(%arg0: i32) -> (i32, i32) {
    %c0_i32 = arith.constant 0 : i32
    %c0_i32_0 = arith.constant 0 : i32
    %c0_i32_1 = arith.constant 0 : i32
    return %c0_i32, %c0_i32_0 : i32, i32
  }
  func.func @transform_7(%arg0: i32) -> (i32, i32) {
    %c0_i32 = arith.constant 0 : i32
    %c0_i32_0 = arith.constant 0 : i32
    %c0_i32_1 = arith.constant 0 : i32
    return %c0_i32, %c0_i32_0 : i32, i32
  }
  func.func @transform_8(%arg0: i32) -> (i32, i32) {
    %c0_i32 = arith.constant 0 : i32
    %c0_i32_0 = arith.constant 0 : i32
    %c0_i32_1 = arith.constant 0 : i32
    return %c0_i32, %c0_i32_0 : i32, i32
  }
  func.func @transform_9(%arg0: i32) -> (i32, i32) {
    %c0_i32 = arith.constant 0 : i32
    %c0_i32_0 = arith.constant 0 : i32
    return %arg0, %c0_i32 : i32, i32
  }
  func.func @transform_10(%arg0: i32) -> (i32, i32) {
    %c0_i32 = arith.constant 0 : i32
    %c0_i32_0 = arith.constant 0 : i32
    return %arg0, %c0_i32 : i32, i32
  }
}

</mosaic_0001>

<llo_original>
// kernel: tpu_custom_call.1
$region0: #{tpu_custom_call.1}
  #allocation0 [shape = 'u32[]', space=smem, size = 0x4, offset = 0x4, fixed_abs, tag = 'smem constant byte address 0x4 - core index']
  #allocation1 [shape = 'u32[144,128]{1,0:T(1,128)}', space=vmem, size = 0x12000, scoped, tag = 'internal scratch']
  %s0 = inlined_call_operand.vmem [shape: s32[8,16], index: 0, kind: input, shape index: {}]
  %s1 = inlined_call_operand.vmem [shape: f32[32,16], index: 1, kind: input, shape index: {}]
  %s2 = inlined_call_operand.hbm [shape: f32[4,16,128], index: 2, kind: input, shape index: {}]
  %s3 = inlined_call_operand.vmem [shape: f32[1,128], index: 3, kind: input, shape index: {}]
  %s4 = inlined_call_operand.vmem [shape: s32[1,128], index: 4, kind: input, shape index: {}]
  %s5 = inlined_call_operand.hbm [shape: f32[128,128], index: 5, kind: input, shape index: {}]
  %s6 = inlined_call_operand.vmem [shape: f32[1,128], index: 6, kind: input, shape index: {}]
  %s7 = inlined_call_operand.hbm [shape: f32[128,128], index: 7, kind: input, shape index: {}]
  %s8 = inlined_call_operand.vmem [shape: f32[1,128], index: 8, kind: input, shape index: {}]
  %s9 = inlined_call_operand.hbm [shape: f32[8,128], index: 9, kind: output, shape index: {0}]
  %s10 = inlined_call_operand.hbm [shape: f32[8,128], index: 10, kind: output, shape index: {1}]
  %11 = xla_tuple %s9, %s10
  %s12 = sld [smem:[#allocation0]]
  $region66: #{tpu_custom_call.1} parent=0
    _
  %s14 = ssub.s32 1, %s12
  %s15 = scalar_select 0, %s14, %s12
  $region1: #{tpu_custom_call.1} parent=0
    #allocation2 [shape = 'u8[32768]{0}', space=vmem, size = 0x8000, scoped, tag = 'input window, operand 2, single buffered']
    #allocation3 [shape = 's32[1]{0}', space=sflag, size = 0x4, scoped, tag = 'scoped memory for tpu_custom_call.1']
    #allocation4 [shape = 's32[1]{0}', space=sflag, size = 0x4, scoped, tag = 'scoped memory for tpu_custom_call.1']
    #allocation5 [shape = 'u8[65536]{0}', space=vmem, size = 0x10000, scoped, tag = 'input window, operand 5, single buffered']
    #allocation6 [shape = 's32[1]{0}', space=sflag, size = 0x4, scoped, tag = 'scoped memory for tpu_custom_call.1']
    #allocation7 [shape = 'u8[65536]{0}', space=vmem, size = 0x10000, scoped, tag = 'input window, operand 7, single buffered']
    #allocation8 [shape = 'u8[4096]{0}', space=vmem, size = 0x1000, scoped, tag = 'output window, operand 0, single buffered']
    #allocation9 [shape = 'u8[4096]{0}', space=vmem, size = 0x1000, scoped, tag = 'output window, operand 1, single buffered']
    #allocation10 [shape = 's32[1]{0}', space=sflag, size = 0x4, scoped, tag = 'scoped memory for tpu_custom_call.1']
    %16 = vsyncpa [#allocation3], 0
    %17 = vsyncpa [#allocation6], 0
    %18 = vsyncpa [#allocation4], 0
    %19 = vsyncpa [#allocation10], 0
    // Predicated region
    $region2: #{tpu_custom_call.1} parent=1 // pred_check
      _
    $region3: #{tpu_custom_call.1} parent=1 // pred_check_branch
      %21 = sbr.rel (0) target = $region5
    $region4: #{tpu_custom_call.1} parent=1 // pred_region
      _
    $region5: #{tpu_custom_call.1} parent=1 // pred_fallthru
      _
    // Predicated region
    $region6: #{tpu_custom_call.1} parent=1 // pred_check
      _
    $region7: #{tpu_custom_call.1} parent=1 // pred_check_branch
      %23 = sbr.rel (0) target = $region9
    $region8: #{tpu_custom_call.1} parent=1 // pred_region
      _
    $region9: #{tpu_custom_call.1} parent=1 // pred_fallthru
      _
    // Predicated region
    $region10: #{tpu_custom_call.1} parent=1 // pred_check
      _
    $region11: #{tpu_custom_call.1} parent=1 // pred_check_branch
      %25 = sbr.rel (0) target = $region13
    $region12: #{tpu_custom_call.1} parent=1 // pred_region
      %s27 = ssub.s32 1024, 1024
      %28 = vsyncadd [#allocation3], %s27
      %s29 = sshll.u32 [#allocation2], 4
      %s30 = int_to_ptr.vmem [resolvable:$true] %s29
      %35 = dma.hbm_to_vmem [thread:$0]  %s2, 1024, %s30, [#allocation3], 128, 128, 8
    $region13: #{tpu_custom_call.1} parent=1 // pred_fallthru
      _
    // Predicated region
    $region14: #{tpu_custom_call.1} parent=1 // pred_check
      _
    $region15: #{tpu_custom_call.1} parent=1 // pred_check_branch
      %37 = sbr.rel (0) target = $region17
    $region16: #{tpu_custom_call.1} parent=1 // pred_region
      _
    $region17: #{tpu_custom_call.1} parent=1 // pred_fallthru
      _
    // Predicated region
    $region18: #{tpu_custom_call.1} parent=1 // pred_check
      _
    $region19: #{tpu_custom_call.1} parent=1 // pred_check_branch
      %39 = sbr.rel (0) target = $region21
    $region20: #{tpu_custom_call.1} parent=1 // pred_region
      _
    $region21: #{tpu_custom_call.1} parent=1 // pred_fallthru
      _
    // Predicated region
    $region22: #{tpu_custom_call.1} parent=1 // pred_check
      _
    $region23: #{tpu_custom_call.1} parent=1 // pred_check_branch
      %41 = sbr.rel (0) target = $region25
    $region24: #{tpu_custom_call.1} parent=1 // pred_region
      %s43 = ssub.s32 2048, 2048
      %44 = vsyncadd [#allocation6], %s43
      %s45 = sshll.u32 [#allocation5], 4
      %s46 = int_to_ptr.vmem [resolvable:$true] %s45
      %51 = dma.hbm_to_vmem [thread:$0]  %s5, 2048, %s46, [#allocation6], 128, 128, 8
    $region25: #{tpu_custom_call.1} parent=1 // pred_fallthru
      _
    // Predicated region
    $region26: #{tpu_custom_call.1} parent=1 // pred_check
      _
    $region27: #{tpu_custom_call.1} parent=1 // pred_check_branch
      %53 = sbr.rel (0) target = $region29
    $region28: #{tpu_custom_call.1} parent=1 // pred_region
      _
    $region29: #{tpu_custom_call.1} parent=1 // pred_fallthru
      _
    // Predicated region
    $region30: #{tpu_custom_call.1} parent=1 // pred_check
      _
    $region31: #{tpu_custom_call.1} parent=1 // pred_check_branch
      %55 = sbr.rel (0) target = $region33
    $region32: #{tpu_custom_call.1} parent=1 // pred_region
      %s57 = ssub.s32 2048, 2048
      %58 = vsyncadd [#allocation6], %s57
      %s59 = sshll.u32 [#allocation7], 4
      %s60 = int_to_ptr.vmem [resolvable:$true] %s59
      %65 = dma.hbm_to_vmem [thread:$0]  %s7, 2048, %s60, [#allocation6], 128, 128, 8
    $region33: #{tpu_custom_call.1} parent=1 // pred_fallthru
      _
    // Predicated region
    $region34: #{tpu_custom_call.1} parent=1 // pred_check
      _
    $region35: #{tpu_custom_call.1} parent=1 // pred_check_branch
      %67 = sbr.rel (0) target = $region37
    $region36: #{tpu_custom_call.1} parent=1 // pred_region
      _
    $region37: #{tpu_custom_call.1} parent=1 // pred_fallthru
      _
    // Predicated region
    $region38: #{tpu_custom_call.1} parent=1 // pred_check
      _
    $region39: #{tpu_custom_call.1} parent=1 // pred_check_branch
      %69 = sbr.rel (0) target = $region41
    $region40: #{tpu_custom_call.1} parent=1 // pred_region
      %70 = dma.done [#allocation3], 1024
    $region41: #{tpu_custom_call.1} parent=1 // pred_fallthru
      _
    // Predicated region
    $region42: #{tpu_custom_call.1} parent=1 // pred_check
      _
    $region43: #{tpu_custom_call.1} parent=1 // pred_check_branch
      %72 = sbr.rel (0) target = $region45
    $region44: #{tpu_custom_call.1} parent=1 // pred_region
      %73 = dma.done [#allocation6], 2048
    $region45: #{tpu_custom_call.1} parent=1 // pred_fallthru
      _
    // Predicated region
    $region46: #{tpu_custom_call.1} parent=1 // pred_check
      _
    $region47: #{tpu_custom_call.1} parent=1 // pred_check_branch
      %75 = sbr.rel (0) target = $region49
    $region48: #{tpu_custom_call.1} parent=1 // pred_region
      %76 = dma.done [#allocation6], 2048
    $region49: #{tpu_custom_call.1} parent=1 // pred_fallthru
      _
    %v77 = vld [vmem:[%s0] sm:$0xff]
    %v78 = vlaneseq
    %v79 = vand.u32 %v78, 127
    %v80 = vlaneseq
    %v81 = vshrl.u32 %v80, 7
    %v82 = vsub.s32 0, %v81
    %v83 = vrot.slane %v77, %v82
    %85 = vbcast.lane.b32.xlu0 %v83, 256
    %v86 = vpop.permute.xlu0 %85
    %s88 = sor.u32 256, 8
    %89 = vbcast.lane.b32.xlu0 %v83, %s88
    %v90 = vpop.permute.xlu0 %89
    %v91 = vlaneseq
    %v92 = vshrl.u32 %v91, 7
    %v93 = vsub.s32 1, %v92
    %v94 = vrot.slane %v77, %v93
    %96 = vbcast.lane.b32.xlu0 %v94, 256
    %v97 = vpop.permute.xlu0 %96
    %s99 = sor.u32 256, 8
    %100 = vbcast.lane.b32.xlu0 %v94, %s99
    %v101 = vpop.permute.xlu0 %100
    %v102 = vlaneseq
    %v103 = vshrl.u32 %v102, 7
    %v104 = vsub.s32 2, %v103
    %v105 = vrot.slane %v77, %v104
    %107 = vbcast.lane.b32.xlu0 %v105, 256
    %v108 = vpop.permute.xlu0 %107
    %s110 = sor.u32 256, 8
    %111 = vbcast.lane.b32.xlu0 %v105, %s110
    %v112 = vpop.permute.xlu0 %111
    %v113 = vlaneseq
    %v114 = vshrl.u32 %v113, 7
    %v115 = vsub.s32 3, %v114
    %v116 = vrot.slane %v77, %v115
    %118 = vbcast.lane.b32.xlu0 %v116, 256
    %v119 = vpop.permute.xlu0 %118
    %s121 = sor.u32 256, 8
    %122 = vbcast.lane.b32.xlu0 %v116, %s121
    %v123 = vpop.permute.xlu0 %122
    %v124 = vlaneseq
    %v125 = vshrl.u32 %v124, 7
    %v126 = vsub.s32 4, %v125
    %v127 = vrot.slane %v77, %v126
    %129 = vbcast.lane.b32.xlu0 %v127, 256
    %v130 = vpop.permute.xlu0 %129
    %s132 = sor.u32 256, 8
    %133 = vbcast.lane.b32.xlu0 %v127, %s132
    %v134 = vpop.permute.xlu0 %133
    %v135 = vlaneseq
    %v136 = vshrl.u32 %v135, 7
    %v137 = vsub.s32 5, %v136
    %v138 = vrot.slane %v77, %v137
    %140 = vbcast.lane.b32.xlu0 %v138, 256
    %v141 = vpop.permute.xlu0 %140
    %s143 = sor.u32 256, 8
    %144 = vbcast.lane.b32.xlu0 %v138, %s143
    %v145 = vpop.permute.xlu0 %144
    %v146 = vlaneseq
    %v147 = vshrl.u32 %v146, 7
    %v148 = vsub.s32 6, %v147
    %v149 = vrot.slane %v77, %v148
    %151 = vbcast.lane.b32.xlu0 %v149, 256
    %v152 = vpop.permute.xlu0 %151
    %s154 = sor.u32 256, 8
    %155 = vbcast.lane.b32.xlu0 %v149, %s154
    %v156 = vpop.permute.xlu0 %155
    %v157 = vlaneseq
    %v158 = vshrl.u32 %v157, 7
    %v159 = vsub.s32 7, %v158
    %v160 = vrot.slane %v77, %v159
    %162 = vbcast.lane.b32.xlu0 %v160, 256
    %v163 = vpop.permute.xlu0 %162
    %s165 = sor.u32 256, 8
    %166 = vbcast.lane.b32.xlu0 %v160, %s165
    %v167 = vpop.permute.xlu0 %166
    %vm168 = vcmp.eq.s32.totalorder %v86, %v79
    %vm169 = vcmp.eq.s32.totalorder %v90, %v79
    %vm170 = vcmp.eq.s32.totalorder %v97, %v79
    %vm171 = vcmp.eq.s32.totalorder %v101, %v79
    %vm172 = vcmp.eq.s32.totalorder %v108, %v79
    %vm173 = vcmp.eq.s32.totalorder %v112, %v79
    %vm174 = vcmp.eq.s32.totalorder %v119, %v79
    %vm175 = vcmp.eq.s32.totalorder %v123, %v79
    %vm176 = vcmp.eq.s32.totalorder %v130, %v79
    %vm177 = vcmp.eq.s32.totalorder %v134, %v79
    %vm178 = vcmp.eq.s32.totalorder %v141, %v79
    %vm179 = vcmp.eq.s32.totalorder %v145, %v79
    %vm180 = vcmp.eq.s32.totalorder %v152, %v79
    %vm181 = vcmp.eq.s32.totalorder %v156, %v79
    %vm182 = vcmp.eq.s32.totalorder %v163, %v79
    %vm183 = vcmp.eq.s32.totalorder %v167, %v79
    %v184 = vsel %vm168, 1, 0
    %v185 = vsel %vm169, 1, 0
    %v186 = vsel %vm170, 1, 0
    %v187 = vsel %vm171, 1, 0
    %v188 = vsel %vm172, 1, 0
    %v189 = vsel %vm173, 1, 0
    %v190 = vsel %vm174, 1, 0
    %v191 = vsel %vm175, 1, 0
    %v192 = vsel %vm176, 1, 0
    %v193 = vsel %vm177, 1, 0
    %v194 = vsel %vm178, 1, 0
    %v195 = vsel %vm179, 1, 0
    %v196 = vsel %vm180, 1, 0
    %v197 = vsel %vm181, 1, 0
    %v198 = vsel %vm182, 1, 0
    %v199 = vsel %vm183, 1, 0
    %v200 = vcvt.s32.f32 %v184
    %v201 = vcvt.s32.f32 %v185
    %v202 = vcvt.s32.f32 %v186
    %v203 = vcvt.s32.f32 %v187
    %v204 = vcvt.s32.f32 %v188
    %v205 = vcvt.s32.f32 %v189
    %v206 = vcvt.s32.f32 %v190
    %v207 = vcvt.s32.f32 %v191
    %v208 = vcvt.s32.f32 %v192
    %v209 = vcvt.s32.f32 %v193
    %v210 = vcvt.s32.f32 %v194
    %v211 = vcvt.s32.f32 %v195
    %v212 = vcvt.s32.f32 %v196
    %v213 = vcvt.s32.f32 %v197
    %v214 = vcvt.s32.f32 %v198
    %v215 = vcvt.s32.f32 %v199
    %v216 = vld [vmem:[%s1] sm:$0xff]
    %v217 = vld [vmem:[%s1 + $0x8] sm:$0xff]
    %v218 = vld [vmem:[%s1 + $0x10] sm:$0xff]
    %v219 = vld [vmem:[%s1 + $0x18] sm:$0xff]
    %vm220 = vcmask 261120
    %v222 = vsel %vm220, %v200, 0
    %v225 = vsel %vm220, %v201, 0
    %v228 = vsel %vm220, %v202, 0
    %v231 = vsel %vm220, %v203, 0
    %v234 = vsel %vm220, %v204, 0
    %v237 = vsel %vm220, %v205, 0
    %v240 = vsel %vm220, %v206, 0
    %v243 = vsel %vm220, %v207, 0
    %v246 = vsel %vm220, %v208, 0
    %v249 = vsel %vm220, %v209, 0
    %v252 = vsel %vm220, %v210, 0
    %v255 = vsel %vm220, %v211, 0
    %v258 = vsel %vm220, %v212, 0
    %v261 = vsel %vm220, %v213, 0
    %v264 = vsel %vm220, %v214, 0
    %v267 = vsel %vm220, %v215, 0
    %269 = vmatprep.subr.mxu0 0.0
    %270 = vmatpush1.msra.mxu0 0.0
    %271 = vmatprep.subr.mxu0 0.0
    %272 = vmatpush1.msra.mxu0 0.0
    %273 = vmatprep.subr.mxu0 0.0
    %274 = vmatpush1.msra.mxu0 0.0
    %275 = vmatprep.subr.mxu0 0.0
    %276 = vmatpush1.msra.mxu0 0.0
    %277 = vmatprep.subr.mxu0 0.0
    %278 = vmatpush1.msra.mxu0 0.0
    %279 = vmatprep.subr.mxu0 0.0
    %280 = vmatpush1.msra.mxu0 0.0
    %281 = vmatprep.subr.mxu0 0.0
    %282 = vmatpush1.msra.mxu0 0.0
    %283 = vmatprep.subr.mxu0 0.0
    %284 = vmatpush1.msra.mxu0 0.0
    %285 = vmatprep.subr.mxu0 0.0
    %286 = vmatpush1.msra.mxu0 0.0
    %287 = vmatprep.subr.mxu0 0.0
    %288 = vmatpush1.msra.mxu0 0.0
    %289 = vmatprep.subr.mxu0 0.0
    %290 = vmatpush1.msra.mxu0 0.0
    %291 = vmatprep.subr.mxu0 0.0
    %292 = vmatpush1.msra.mxu0 0.0
    %293 = vmatprep.subr.mxu0 0.0
    %294 = vmatpush1.msra.mxu0 %v219
    %295 = vmatprep.subr.mxu0 0.0
    %296 = vmatpush1.msra.mxu0 %v218
    %297 = vmatprep.subr.mxu0 0.0
    %298 = vmatpush1.msra.mxu0 %v217
    %299 = vmatprep.subr.mxu0 0.0
    %300 = vmatpush1.msra.mxu0 %v216
    %301 = vmatprep.subr.mxu0 0.0
    %302 = vmatpush2.msra.mxu0 0.0
    %303 = vmatprep.subr.mxu0 0.0
    %304 = vmatpush2.msra.mxu0 0.0
    %305 = vmatprep.subr.mxu0 0.0
    %306 = vmatpush2.msra.mxu0 0.0
    %307 = vmatprep.subr.mxu0 0.0
    %308 = vmatpush2.msra.mxu0 0.0
    %309 = vmatprep.subr.mxu0 0.0
    %310 = vmatpush2.msra.mxu0 0.0
    %311 = vmatprep.subr.mxu0 0.0
    %312 = vmatpush2.msra.mxu0 0.0
    %313 = vmatprep.subr.mxu0 0.0
    %314 = vmatpush2.msra.mxu0 0.0
    %315 = vmatprep.subr.mxu0 0.0
    %316 = vmatpush2.msra.mxu0 0.0
    %317 = vmatprep.subr.mxu0 0.0
    %318 = vmatpush2.msra.mxu0 0.0
    %319 = vmatprep.subr.mxu0 0.0
    %320 = vmatpush2.msra.mxu0 0.0
    %321 = vmatprep.subr.mxu0 0.0
    %322 = vmatpush2.msra.mxu0 0.0
    %323 = vmatprep.subr.mxu0 0.0
    %324 = vmatpush2.msra.mxu0 0.0
    %325 = vmatprep.subr.mxu0 0.0
    %326 = vmatpush2.msra.mxu0 0.0
    %327 = vmatprep.subr.mxu0 0.0
    %328 = vmatpush2.msra.mxu0 0.0
    %329 = vmatprep.subr.mxu0 0.0
    %330 = vmatpush2.msra.mxu0 0.0
    %331 = vmatprep.subr.mxu0 0.0
    %332 = vmatpush2.msra.mxu0 0.0
    %333 = vmatprep.mubr.f32.mxu0 0.0
    %334 = vmatmul.mubr.f32.gmra.mxu0 %v222
    %v335 = vpop.f32.mrf.mxu0
    %v336 = vadd.f32 0.0, %v335
    %v337 = vpop.f32.mrf.mxu0
    %338 = vmatprep.mubr.f32.mxu0 0.0
    %339 = vmatmul.mubr.f32.gmra.mxu0 %v225
    %v340 = vpop.f32.mrf.mxu0
    %v341 = vadd.f32 0.0, %v340
    %v342 = vpop.f32.mrf.mxu0
    %343 = vmatprep.mubr.f32.mxu0 0.0
    %344 = vmatmul.mubr.f32.gmra.mxu0 %v228
    %v345 = vpop.f32.mrf.mxu0
    %v346 = vadd.f32 0.0, %v345
    %v347 = vpop.f32.mrf.mxu0
    %348 = vmatprep.mubr.f32.mxu0 0.0
    %349 = vmatmul.mubr.f32.gmra.mxu0 %v231
    %v350 = vpop.f32.mrf.mxu0
    %v351 = vadd.f32 0.0, %v350
    %v352 = vpop.f32.mrf.mxu0
    %353 = vmatprep.mubr.f32.mxu0 0.0
    %354 = vmatmul.mubr.f32.gmra.mxu0 %v234
    %v355 = vpop.f32.mrf.mxu0
    %v356 = vadd.f32 0.0, %v355
    %v357 = vpop.f32.mrf.mxu0
    %358 = vmatprep.mubr.f32.mxu0 0.0
    %359 = vmatmul.mubr.f32.gmra.mxu0 %v237
    %v360 = vpop.f32.mrf.mxu0
    %v361 = vadd.f32 0.0, %v360
    %v362 = vpop.f32.mrf.mxu0
    %363 = vmatprep.mubr.f32.mxu0 0.0
    %364 = vmatmul.mubr.f32.gmra.mxu0 %v240
    %v365 = vpop.f32.mrf.mxu0
    %v366 = vadd.f32 0.0, %v365
    %v367 = vpop.f32.mrf.mxu0
    %368 = vmatprep.mubr.f32.mxu0 0.0
    %369 = vmatmul.mubr.f32.gmra.mxu0 %v243
    %v370 = vpop.f32.mrf.mxu0
    %v371 = vadd.f32 0.0, %v370
    %v372 = vpop.f32.mrf.mxu0
    %373 = vmatprep.mubr.f32.mxu0 0.0
    %374 = vmatmul.mubr.f32.gmra.mxu0 %v246
    %v375 = vpop.f32.mrf.mxu0
    %v376 = vadd.f32 0.0, %v375
    %v377 = vpop.f32.mrf.mxu0
    %378 = vmatprep.mubr.f32.mxu0 0.0
    %379 = vmatmul.mubr.f32.gmra.mxu0 %v249
    %v380 = vpop.f32.mrf.mxu0
    %v381 = vadd.f32 0.0, %v380
    %v382 = vpop.f32.mrf.mxu0
    %383 = vmatprep.mubr.f32.mxu0 0.0
    %384 = vmatmul.mubr.f32.gmra.mxu0 %v252
    %v385 = vpop.f32.mrf.mxu0
    %v386 = vadd.f32 0.0, %v385
    %v387 = vpop.f32.mrf.mxu0
    %388 = vmatprep.mubr.f32.mxu0 0.0
    %389 = vmatmul.mubr.f32.gmra.mxu0 %v255
    %v390 = vpop.f32.mrf.mxu0
    %v391 = vadd.f32 0.0, %v390
    %v392 = vpop.f32.mrf.mxu0
    %393 = vmatprep.mubr.f32.mxu0 0.0
    %394 = vmatmul.mubr.f32.gmra.mxu0 %v258
    %v395 = vpop.f32.mrf.mxu0
    %v396 = vadd.f32 0.0, %v395
    %v397 = vpop.f32.mrf.mxu0
    %398 = vmatprep.mubr.f32.mxu0 0.0
    %399 = vmatmul.mubr.f32.gmra.mxu0 %v261
    %v400 = vpop.f32.mrf.mxu0
    %v401 = vadd.f32 0.0, %v400
    %v402 = vpop.f32.mrf.mxu0
    %403 = vmatprep.mubr.f32.mxu0 0.0
    %404 = vmatmul.mubr.f32.gmra.mxu0 %v264
    %v405 = vpop.f32.mrf.mxu0
    %v406 = vadd.f32 0.0, %v405
    %v407 = vpop.f32.mrf.mxu0
    %408 = vmatprep.mubr.f32.mxu0 0.0
    %409 = vmatmul.mubr.f32.gmra.mxu0 %v267
    %v410 = vpop.f32.mrf.mxu0
    %v411 = vadd.f32 0.0, %v410
    %v412 = vpop.f32.mrf.mxu0
    %413 = vdwg.mxu0
    %v414 = vld [vmem:[#allocation2] sm:$0xff]
    %v415 = vld [vmem:[#allocation2 + $0x8] sm:$0xff]
    %v416 = vrot.slane %v336, 1
    %v417 = vrot.slane %v341, 1
    %v418 = vrot.slane %v346, 1
    %v419 = vrot.slane %v351, 1
    %v420 = vrot.slane %v356, 1
    %v421 = vrot.slane %v361, 1
    %v422 = vrot.slane %v366, 1
    %v423 = vrot.slane %v371, 1
    %v424 = vrot.slane %v376, 1
    %v425 = vrot.slane %v381, 1
    %v426 = vrot.slane %v386, 1
    %v427 = vrot.slane %v391, 1
    %v428 = vrot.slane %v396, 1
    %v429 = vrot.slane %v401, 1
    %v430 = vrot.slane %v406, 1
    %v431 = vrot.slane %v411, 1
    %v432 = vlaneseq
    %v433 = vshrl.u32 %v432, 7
    %vm434 = vcmp.lt.s32.totalorder %v433, 7
    %v435 = vsel %vm434, %v430, %v431
    %v436 = vsel %vm434, %v429, %v430
    %v437 = vsel %vm434, %v428, %v429
    %v438 = vsel %vm434, %v427, %v428
    %v439 = vsel %vm434, %v426, %v427
    %v440 = vsel %vm434, %v425, %v426
    %v441 = vsel %vm434, %v424, %v425
    %v442 = vsel %vm434, %v423, %v424
    %v443 = vsel %vm434, %v422, %v423
    %v444 = vsel %vm434, %v421, %v422
    %v445 = vsel %vm434, %v420, %v421
    %v446 = vsel %vm434, %v419, %v420
    %v447 = vsel %vm434, %v418, %v419
    %v448 = vsel %vm434, %v417, %v418
    %v449 = vsel %vm434, %v416, %v417
    %v450 = vsel %vm434, %v431, %v416
    %s451 = scalar_lea.vmem [#allocation2], 16
    %v452 = vld [vmem:[%s451] sm:$0xff]
    %v453 = vld [vmem:[%s451 + $0x8] sm:$0xff]
    %vm454 = vcmask 130048
    %v456 = vsel %vm454, %v449, 0
    %v459 = vsel %vm454, %v448, 0
    %v462 = vsel %vm454, %v447, 0
    %v465 = vsel %vm454, %v446, 0
    %v468 = vsel %vm454, %v445, 0
    %v471 = vsel %vm454, %v444, 0
    %v474 = vsel %vm454, %v443, 0
    %v477 = vsel %vm454, %v442, 0
    %v480 = vsel %vm454, %v441, 0
    %v483 = vsel %vm454, %v440, 0
    %v486 = vsel %vm454, %v439, 0
    %v489 = vsel %vm454, %v438, 0
    %v492 = vsel %vm454, %v437, 0
    %v495 = vsel %vm454, %v436, 0
    %v498 = vsel %vm454, %v435, 0
    %v501 = vsel %vm454, %v450, 0
    %503 = vmatprep.subr.mxu0 0.0
    %504 = vmatpush1.msra.mxu0 0.0
    %505 = vmatprep.subr.mxu0 0.0
    %506 = vmatpush1.msra.mxu0 0.0
    %507 = vmatprep.subr.mxu0 0.0
    %508 = vmatpush1.msra.mxu0 0.0
    %509 = vmatprep.subr.mxu0 0.0
    %510 = vmatpush1.msra.mxu0 0.0
    %511 = vmatprep.subr.mxu0 0.0
    %512 = vmatpush1.msra.mxu0 0.0
    %513 = vmatprep.subr.mxu0 0.0
    %514 = vmatpush1.msra.mxu0 0.0
    %515 = vmatprep.subr.mxu0 0.0
    %516 = vmatpush1.msra.mxu0 0.0
    %517 = vmatprep.subr.mxu0 0.0
    %518 = vmatpush1.msra.mxu0 0.0
    %519 = vmatprep.subr.mxu0 0.0
    %520 = vmatpush1.msra.mxu0 0.0
    %521 = vmatprep.subr.mxu0 0.0
    %522 = vmatpush1.msra.mxu0 0.0
    %523 = vmatprep.subr.mxu0 0.0
    %524 = vmatpush1.msra.mxu0 0.0
    %525 = vmatprep.subr.mxu0 0.0
    %526 = vmatpush1.msra.mxu0 0.0
    %527 = vmatprep.subr.mxu0 0.0
    %528 = vmatpush1.msra.mxu0 0.0
    %529 = vmatprep.subr.mxu0 0.0
    %530 = vmatpush1.msra.mxu0 0.0
    %531 = vmatprep.subr.mxu0 0.0
    %532 = vmatpush1.msra.mxu0 %v453
    %533 = vmatprep.subr.mxu0 0.0
    %534 = vmatpush1.msra.mxu0 %v452
    %535 = vmatprep.subr.mxu0 0.0
    %536 = vmatpush2.msra.mxu0 0.0
    %537 = vmatprep.subr.mxu0 0.0
    %538 = vmatpush2.msra.mxu0 0.0
    %539 = vmatprep.subr.mxu0 0.0
    %540 = vmatpush2.msra.mxu0 0.0
    %541 = vmatprep.subr.mxu0 0.0
    %542 = vmatpush2.msra.mxu0 0.0
    %543 = vmatprep.subr.mxu0 0.0
    %544 = vmatpush2.msra.mxu0 0.0
    %545 = vmatprep.subr.mxu0 0.0
    %546 = vmatpush2.msra.mxu0 0.0
    %547 = vmatprep.subr.mxu0 0.0
    %548 = vmatpush2.msra.mxu0 0.0
    %549 = vmatprep.subr.mxu0 0.0
    %550 = vmatpush2.msra.mxu0 0.0
    %551 = vmatprep.subr.mxu0 0.0
    %552 = vmatpush2.msra.mxu0 0.0
    %553 = vmatprep.subr.mxu0 0.0
    %554 = vmatpush2.msra.mxu0 0.0
    %555 = vmatprep.subr.mxu0 0.0
    %556 = vmatpush2.msra.mxu0 0.0
    %557 = vmatprep.subr.mxu0 0.0
    %558 = vmatpush2.msra.mxu0 0.0
    %559 = vmatprep.subr.mxu0 0.0
    %560 = vmatpush2.msra.mxu0 0.0
    %561 = vmatprep.subr.mxu0 0.0
    %562 = vmatpush2.msra.mxu0 0.0
    %563 = vmatprep.subr.mxu0 0.0
    %564 = vmatpush2.msra.mxu0 0.0
    %565 = vmatprep.subr.mxu0 0.0
    %566 = vmatpush2.msra.mxu0 0.0
    %567 = vmatprep.mubr.f32.mxu0 0.0
    %568 = vmatmul.mubr.f32.gmra.mxu0 %v456
    %v569 = vpop.f32.mrf.mxu0
    %v570 = vadd.f32 0.0, %v569
    %v571 = vpop.f32.mrf.mxu0
    %572 = vmatprep.mubr.f32.mxu0 0.0
    %573 = vmatmul.mubr.f32.gmra.mxu0 %v459
    %v574 = vpop.f32.mrf.mxu0
    %v575 = vadd.f32 0.0, %v574
    %v576 = vpop.f32.mrf.mxu0
    %577 = vmatprep.mubr.f32.mxu0 0.0
    %578 = vmatmul.mubr.f32.gmra.mxu0 %v462
    %v579 = vpop.f32.mrf.mxu0
    %v580 = vadd.f32 0.0, %v579
    %v581 = vpop.f32.mrf.mxu0
    %582 = vmatprep.mubr.f32.mxu0 0.0
    %583 = vmatmul.mubr.f32.gmra.mxu0 %v465
    %v584 = vpop.f32.mrf.mxu0
    %v585 = vadd.f32 0.0, %v584
    %v586 = vpop.f32.mrf.mxu0
    %587 = vmatprep.mubr.f32.mxu0 0.0
    %588 = vmatmul.mubr.f32.gmra.mxu0 %v468
    %v589 = vpop.f32.mrf.mxu0
    %v590 = vadd.f32 0.0, %v589
    %v591 = vpop.f32.mrf.mxu0
    %592 = vmatprep.mubr.f32.mxu0 0.0
    %593 = vmatmul.mubr.f32.gmra.mxu0 %v471
    %v594 = vpop.f32.mrf.mxu0
    %v595 = vadd.f32 0.0, %v594
    %v596 = vpop.f32.mrf.mxu0
    %597 = vmatprep.mubr.f32.mxu0 0.0
    %598 = vmatmul.mubr.f32.gmra.mxu0 %v474
    %v599 = vpop.f32.mrf.mxu0
    %v600 = vadd.f32 0.0, %v599
    %v601 = vpop.f32.mrf.mxu0
    %602 = vmatprep.mubr.f32.mxu0 0.0
    %603 = vmatmul.mubr.f32.gmra.mxu0 %v477
    %v604 = vpop.f32.mrf.mxu0
    %v605 = vadd.f32 0.0, %v604
    %v606 = vpop.f32.mrf.mxu0
    %607 = vmatprep.mubr.f32.mxu0 0.0
    %608 = vmatmul.mubr.f32.gmra.mxu0 %v480
    %v609 = vpop.f32.mrf.mxu0
    %v610 = vadd.f32 0.0, %v609
    %v611 = vpop.f32.mrf.mxu0
    %612 = vmatprep.mubr.f32.mxu0 0.0
    %613 = vmatmul.mubr.f32.gmra.mxu0 %v483
    %v614 = vpop.f32.mrf.mxu0
    %v615 = vadd.f32 0.0, %v614
    %v616 = vpop.f32.mrf.mxu0
    %617 = vmatprep.mubr.f32.mxu0 0.0
    %618 = vmatmul.mubr.f32.gmra.mxu0 %v486
    %v619 = vpop.f32.mrf.mxu0
    %v620 = vadd.f32 0.0, %v619
    %v621 = vpop.f32.mrf.mxu0
    %622 = vmatprep.mubr.f32.mxu0 0.0
    %623 = vmatmul.mubr.f32.gmra.mxu0 %v489
    %v624 = vpop.f32.mrf.mxu0
    %v625 = vadd.f32 0.0, %v624
    %v626 = vpop.f32.mrf.mxu0
    %627 = vmatprep.mubr.f32.mxu0 0.0
    %628 = vmatmul.mubr.f32.gmra.mxu0 %v492
    %v629 = vpop.f32.mrf.mxu0
    %v630 = vadd.f32 0.0, %v629
    %v631 = vpop.f32.mrf.mxu0
    %632 = vmatprep.mubr.f32.mxu0 0.0
    %633 = vmatmul.mubr.f32.gmra.mxu0 %v495
    %v634 = vpop.f32.mrf.mxu0
    %v635 = vadd.f32 0.0, %v634
    %v636 = vpop.f32.mrf.mxu0
    %637 = vmatprep.mubr.f32.mxu0 0.0
    %638 = vmatmul.mubr.f32.gmra.mxu0 %v498
    %v639 = vpop.f32.mrf.mxu0
    %v640 = vadd.f32 0.0, %v639
    %v641 = vpop.f32.mrf.mxu0
    %642 = vmatprep.mubr.f32.mxu0 0.0
    %643 = vmatmul.mubr.f32.gmra.mxu0 %v501
    %v644 = vpop.f32.mrf.mxu0
    %v645 = vadd.f32 0.0, %v644
    %v646 = vpop.f32.mrf.mxu0
    %647 = vdwg.mxu0
    %v649 = vsel %vm454, %v336, 0
    %v652 = vsel %vm454, %v341, 0
    %v655 = vsel %vm454, %v346, 0
    %v658 = vsel %vm454, %v351, 0
    %v661 = vsel %vm454, %v356, 0
    %v664 = vsel %vm454, %v361, 0
    %v667 = vsel %vm454, %v366, 0
    %v670 = vsel %vm454, %v371, 0
    %v673 = vsel %vm454, %v376, 0
    %v676 = vsel %vm454, %v381, 0
    %v679 = vsel %vm454, %v386, 0
    %v682 = vsel %vm454, %v391, 0
    %v685 = vsel %vm454, %v396, 0
    %v688 = vsel %vm454, %v401, 0
    %v691 = vsel %vm454, %v406, 0
    %v694 = vsel %vm454, %v411, 0
    %696 = vmatprep.subr.mxu0 0.0
    %697 = vmatpush1.msra.mxu0 0.0
    %698 = vmatprep.subr.mxu0 0.0
    %699 = vmatpush1.msra.mxu0 0.0
    %700 = vmatprep.subr.mxu0 0.0
    %701 = vmatpush1.msra.mxu0 0.0
    %702 = vmatprep.subr.mxu0 0.0
    %703 = vmatpush1.msra.mxu0 0.0
    %704 = vmatprep.subr.mxu0 0.0
    %705 = vmatpush1.msra.mxu0 0.0
    %706 = vmatprep.subr.mxu0 0.0
    %707 = vmatpush1.msra.mxu0 0.0
    %708 = vmatprep.subr.mxu0 0.0
    %709 = vmatpush1.msra.mxu0 0.0
    %710 = vmatprep.subr.mxu0 0.0
    %711 = vmatpush1.msra.mxu0 0.0
    %712 = vmatprep.subr.mxu0 0.0
    %713 = vmatpush1.msra.mxu0 0.0
    %714 = vmatprep.subr.mxu0 0.0
    %715 = vmatpush1.msra.mxu0 0.0
    %716 = vmatprep.subr.mxu0 0.0
    %717 = vmatpush1.msra.mxu0 0.0
    %718 = vmatprep.subr.mxu0 0.0
    %719 = vmatpush1.msra.mxu0 0.0
    %720 = vmatprep.subr.mxu0 0.0
    %721 = vmatpush1.msra.mxu0 0.0
    %722 = vmatprep.subr.mxu0 0.0
    %723 = vmatpush1.msra.mxu0 0.0
    %724 = vmatprep.subr.mxu0 0.0
    %725 = vmatpush1.msra.mxu0 %v415
    %726 = vmatprep.subr.mxu0 0.0
    %727 = vmatpush1.msra.mxu0 %v414
    %728 = vmatprep.subr.mxu0 0.0
    %729 = vmatpush2.msra.mxu0 0.0
    %730 = vmatprep.subr.mxu0 0.0
    %731 = vmatpush2.msra.mxu0 0.0
    %732 = vmatprep.subr.mxu0 0.0
    %733 = vmatpush2.msra.mxu0 0.0
    %734 = vmatprep.subr.mxu0 0.0
    %735 = vmatpush2.msra.mxu0 0.0
    %736 = vmatprep.subr.mxu0 0.0
    %737 = vmatpush2.msra.mxu0 0.0
    %738 = vmatprep.subr.mxu0 0.0
    %739 = vmatpush2.msra.mxu0 0.0
    %740 = vmatprep.subr.mxu0 0.0
    %741 = vmatpush2.msra.mxu0 0.0
    %742 = vmatprep.subr.mxu0 0.0
    %743 = vmatpush2.msra.mxu0 0.0
    %744 = vmatprep.subr.mxu0 0.0
    %745 = vmatpush2.msra.mxu0 0.0
    %746 = vmatprep.subr.mxu0 0.0
    %747 = vmatpush2.msra.mxu0 0.0
    %748 = vmatprep.subr.mxu0 0.0
    %749 = vmatpush2.msra.mxu0 0.0
    %750 = vmatprep.subr.mxu0 0.0
    %751 = vmatpush2.msra.mxu0 0.0
    %752 = vmatprep.subr.mxu0 0.0
    %753 = vmatpush2.msra.mxu0 0.0
    %754 = vmatprep.subr.mxu0 0.0
    %755 = vmatpush2.msra.mxu0 0.0
    %756 = vmatprep.subr.mxu0 0.0
    %757 = vmatpush2.msra.mxu0 0.0
    %758 = vmatprep.subr.mxu0 0.0
    %759 = vmatpush2.msra.mxu0 0.0
    %760 = vmatprep.mubr.f32.mxu0 0.0
    %761 = vmatmul.mubr.f32.gmra.mxu0 %v649
    %v762 = vpop.f32.mrf.mxu0
    %v763 = vadd.f32 %v570, %v762
    %v764 = vpop.f32.mrf.mxu0
    %765 = vmatprep.mubr.f32.mxu0 0.0
    %766 = vmatmul.mubr.f32.gmra.mxu0 %v652
    %v767 = vpop.f32.mrf.mxu0
    %v768 = vadd.f32 %v575, %v767
    %v769 = vpop.f32.mrf.mxu0
    %770 = vmatprep.mubr.f32.mxu0 0.0
    %771 = vmatmul.mubr.f32.gmra.mxu0 %v655
    %v772 = vpop.f32.mrf.mxu0
    %v773 = vadd.f32 %v580, %v772
    %v774 = vpop.f32.mrf.mxu0
    %775 = vmatprep.mubr.f32.mxu0 0.0
    %776 = vmatmul.mubr.f32.gmra.mxu0 %v658
    %v777 = vpop.f32.mrf.mxu0
    %v778 = vadd.f32 %v585, %v777
    %v779 = vpop.f32.mrf.mxu0
    %780 = vmatprep.mubr.f32.mxu0 0.0
    %781 = vmatmul.mubr.f32.gmra.mxu0 %v661
    %v782 = vpop.f32.mrf.mxu0
    %v783 = vadd.f32 %v590, %v782
    %v784 = vpop.f32.mrf.mxu0
    %785 = vmatprep.mubr.f32.mxu0 0.0
    %786 = vmatmul.mubr.f32.gmra.mxu0 %v664
    %v787 = vpop.f32.mrf.mxu0
    %v788 = vadd.f32 %v595, %v787
    %v789 = vpop.f32.mrf.mxu0
    %790 = vmatprep.mubr.f32.mxu0 0.0
    %791 = vmatmul.mubr.f32.gmra.mxu0 %v667
    %v792 = vpop.f32.mrf.mxu0
    %v793 = vadd.f32 %v600, %v792
    %v794 = vpop.f32.mrf.mxu0
    %795 = vmatprep.mubr.f32.mxu0 0.0
    %796 = vmatmul.mubr.f32.gmra.mxu0 %v670
    %v797 = vpop.f32.mrf.mxu0
    %v798 = vadd.f32 %v605, %v797
    %v799 = vpop.f32.mrf.mxu0
    %800 = vmatprep.mubr.f32.mxu0 0.0
    %801 = vmatmul.mubr.f32.gmra.mxu0 %v673
    %v802 = vpop.f32.mrf.mxu0
    %v803 = vadd.f32 %v610, %v802
    %v804 = vpop.f32.mrf.mxu0
    %805 = vmatprep.mubr.f32.mxu0 0.0
    %806 = vmatmul.mubr.f32.gmra.mxu0 %v676
    %v807 = vpop.f32.mrf.mxu0
    %v808 = vadd.f32 %v615, %v807
    %v809 = vpop.f32.mrf.mxu0
    %810 = vmatprep.mubr.f32.mxu0 0.0
    %811 = vmatmul.mubr.f32.gmra.mxu0 %v679
    %v812 = vpop.f32.mrf.mxu0
    %v813 = vadd.f32 %v620, %v812
    %v814 = vpop.f32.mrf.mxu0
    %815 = vmatprep.mubr.f32.mxu0 0.0
    %816 = vmatmul.mubr.f32.gmra.mxu0 %v682
    %v817 = vpop.f32.mrf.mxu0
    %v818 = vadd.f32 %v625, %v817
    %v819 = vpop.f32.mrf.mxu0
    %820 = vmatprep.mubr.f32.mxu0 0.0
    %821 = vmatmul.mubr.f32.gmra.mxu0 %v685
    %v822 = vpop.f32.mrf.mxu0
    %v823 = vadd.f32 %v630, %v822
    %v824 = vpop.f32.mrf.mxu0
    %825 = vmatprep.mubr.f32.mxu0 0.0
    %826 = vmatmul.mubr.f32.gmra.mxu0 %v688
    %v827 = vpop.f32.mrf.mxu0
    %v828 = vadd.f32 %v635, %v827
    %v829 = vpop.f32.mrf.mxu0
    %830 = vmatprep.mubr.f32.mxu0 0.0
    %831 = vmatmul.mubr.f32.gmra.mxu0 %v691
    %v832 = vpop.f32.mrf.mxu0
    %v833 = vadd.f32 %v640, %v832
    %v834 = vpop.f32.mrf.mxu0
    %835 = vmatprep.mubr.f32.mxu0 0.0
    %836 = vmatmul.mubr.f32.gmra.mxu0 %v694
    %v837 = vpop.f32.mrf.mxu0
    %v838 = vadd.f32 %v645, %v837
    %v839 = vpop.f32.mrf.mxu0
    %840 = vdwg.mxu0
    %v841 = vrot.slane %v336, 2
    %v842 = vrot.slane %v341, 2
    %v843 = vrot.slane %v346, 2
    %v844 = vrot.slane %v351, 2
    %v845 = vrot.slane %v356, 2
    %v846 = vrot.slane %v361, 2
    %v847 = vrot.slane %v366, 2
    %v848 = vrot.slane %v371, 2
    %v849 = vrot.slane %v376, 2
    %v850 = vrot.slane %v381, 2
    %v851 = vrot.slane %v386, 2
    %v852 = vrot.slane %v391, 2
    %v853 = vrot.slane %v396, 2
    %v854 = vrot.slane %v401, 2
    %v855 = vrot.slane %v406, 2
    %v856 = vrot.slane %v411, 2
    %vm857 = vcmp.lt.s32.totalorder %v433, 6
    %v858 = vsel %vm857, %v855, %v856
    %v859 = vsel %vm857, %v854, %v855
    %v860 = vsel %vm857, %v853, %v854
    %v861 = vsel %vm857, %v852, %v853
    %v862 = vsel %vm857, %v851, %v852
    %v863 = vsel %vm857, %v850, %v851
    %v864 = vsel %vm857, %v849, %v850
    %v865 = vsel %vm857, %v848, %v849
    %v866 = vsel %vm857, %v847, %v848
    %v867 = vsel %vm857, %v846, %v847
    %v868 = vsel %vm857, %v845, %v846
    %v869 = vsel %vm857, %v844, %v845
    %v870 = vsel %vm857, %v843, %v844
    %v871 = vsel %vm857, %v842, %v843
    %v872 = vsel %vm857, %v841, %v842
    %v873 = vsel %vm857, %v856, %v841
    %s874 = scalar_lea.vmem [#allocation2], 32
    %v875 = vld [vmem:[%s874] sm:$0xff]
    %v876 = vld [vmem:[%s874 + $0x8] sm:$0xff]
    %v878 = vsel %vm454, %v872, 0
    %v881 = vsel %vm454, %v871, 0
    %v884 = vsel %vm454, %v870, 0
    %v887 = vsel %vm454, %v869, 0
    %v890 = vsel %vm454, %v868, 0
    %v893 = vsel %vm454, %v867, 0
    %v896 = vsel %vm454, %v866, 0
    %v899 = vsel %vm454, %v865, 0
    %v902 = vsel %vm454, %v864, 0
    %v905 = vsel %vm454, %v863, 0
    %v908 = vsel %vm454, %v862, 0
    %v911 = vsel %vm454, %v861, 0
    %v914 = vsel %vm454, %v860, 0
    %v917 = vsel %vm454, %v859, 0
    %v920 = vsel %vm454, %v858, 0
    %v923 = vsel %vm454, %v873, 0
    %925 = vmatprep.subr.mxu0 0.0
    %926 = vmatpush1.msra.mxu0 0.0
    %927 = vmatprep.subr.mxu0 0.0
    %928 = vmatpush1.msra.mxu0 0.0
    %929 = vmatprep.subr.mxu0 0.0
    %930 = vmatpush1.msra.mxu0 0.0
    %931 = vmatprep.subr.mxu0 0.0
    %932 = vmatpush1.msra.mxu0 0.0
    %933 = vmatprep.subr.mxu0 0.0
    %934 = vmatpush1.msra.mxu0 0.0
    %935 = vmatprep.subr.mxu0 0.0
    %936 = vmatpush1.msra.mxu0 0.0
    %937 = vmatprep.subr.mxu0 0.0
    %938 = vmatpush1.msra.mxu0 0.0
    %939 = vmatprep.subr.mxu0 0.0
    %940 = vmatpush1.msra.mxu0 0.0
    %941 = vmatprep.subr.mxu0 0.0
    %942 = vmatpush1.msra.mxu0 0.0
    %943 = vmatprep.subr.mxu0 0.0
    %944 = vmatpush1.msra.mxu0 0.0
    %945 = vmatprep.subr.mxu0 0.0
    %946 = vmatpush1.msra.mxu0 0.0
    %947 = vmatprep.subr.mxu0 0.0
    %948 = vmatpush1.msra.mxu0 0.0
    %949 = vmatprep.subr.mxu0 0.0
    %950 = vmatpush1.msra.mxu0 0.0
    %951 = vmatprep.subr.mxu0 0.0
    %952 = vmatpush1.msra.mxu0 0.0
    %953 = vmatprep.subr.mxu0 0.0
    %954 = vmatpush1.msra.mxu0 %v876
    %955 = vmatprep.subr.mxu0 0.0
    %956 = vmatpush1.msra.mxu0 %v875
    %957 = vmatprep.subr.mxu0 0.0
    %958 = vmatpush2.msra.mxu0 0.0
    %959 = vmatprep.subr.mxu0 0.0
    %960 = vmatpush2.msra.mxu0 0.0
    %961 = vmatprep.subr.mxu0 0.0
    %962 = vmatpush2.msra.mxu0 0.0
    %963 = vmatprep.subr.mxu0 0.0
    %964 = vmatpush2.msra.mxu0 0.0
    %965 = vmatprep.subr.mxu0 0.0
    %966 = vmatpush2.msra.mxu0 0.0
    %967 = vmatprep.subr.mxu0 0.0
    %968 = vmatpush2.msra.mxu0 0.0
    %969 = vmatprep.subr.mxu0 0.0
    %970 = vmatpush2.msra.mxu0 0.0
    %971 = vmatprep.subr.mxu0 0.0
    %972 = vmatpush2.msra.mxu0 0.0
    %973 = vmatprep.subr.mxu0 0.0
    %974 = vmatpush2.msra.mxu0 0.0
    %975 = vmatprep.subr.mxu0 0.0
    %976 = vmatpush2.msra.mxu0 0.0
    %977 = vmatprep.subr.mxu0 0.0
    %978 = vmatpush2.msra.mxu0 0.0
    %979 = vmatprep.subr.mxu0 0.0
    %980 = vmatpush2.msra.mxu0 0.0
    %981 = vmatprep.subr.mxu0 0.0
    %982 = vmatpush2.msra.mxu0 0.0
    %983 = vmatprep.subr.mxu0 0.0
    %984 = vmatpush2.msra.mxu0 0.0
    %985 = vmatprep.subr.mxu0 0.0
    %986 = vmatpush2.msra.mxu0 0.0
    %987 = vmatprep.subr.mxu0 0.0
    %988 = vmatpush2.msra.mxu0 0.0
    %989 = vmatprep.mubr.f32.mxu0 0.0
    %990 = vmatmul.mubr.f32.gmra.mxu0 %v878
    %v991 = vpop.f32.mrf.mxu0
    %v992 = vadd.f32 0.0, %v991
    %v993 = vpop.f32.mrf.mxu0
    %994 = vmatprep.mubr.f32.mxu0 0.0
    %995 = vmatmul.mubr.f32.gmra.mxu0 %v881
    %v996 = vpop.f32.mrf.mxu0
    %v997 = vadd.f32 0.0, %v996
    %v998 = vpop.f32.mrf.mxu0
    %999 = vmatprep.mubr.f32.mxu0 0.0
    %1000 = vmatmul.mubr.f32.gmra.mxu0 %v884
    %v1001 = vpop.f32.mrf.mxu0
    %v1002 = vadd.f32 0.0, %v1001
    %v1003 = vpop.f32.mrf.mxu0
    %1004 = vmatprep.mubr.f32.mxu0 0.0
    %1005 = vmatmul.mubr.f32.gmra.mxu0 %v887
    %v1006 = vpop.f32.mrf.mxu0
    %v1007 = vadd.f32 0.0, %v1006
    %v1008 = vpop.f32.mrf.mxu0
    %1009 = vmatprep.mubr.f32.mxu0 0.0
    %1010 = vmatmul.mubr.f32.gmra.mxu0 %v890
    %v1011 = vpop.f32.mrf.mxu0
    %v1012 = vadd.f32 0.0, %v1011
    %v1013 = vpop.f32.mrf.mxu0
    %1014 = vmatprep.mubr.f32.mxu0 0.0
    %1015 = vmatmul.mubr.f32.gmra.mxu0 %v893
    %v1016 = vpop.f32.mrf.mxu0
    %v1017 = vadd.f32 0.0, %v1016
    %v1018 = vpop.f32.mrf.mxu0
    %1019 = vmatprep.mubr.f32.mxu0 0.0
    %1020 = vmatmul.mubr.f32.gmra.mxu0 %v896
    %v1021 = vpop.f32.mrf.mxu0
    %v1022 = vadd.f32 0.0, %v1021
    %v1023 = vpop.f32.mrf.mxu0
    %1024 = vmatprep.mubr.f32.mxu0 0.0
    %1025 = vmatmul.mubr.f32.gmra.mxu0 %v899
    %v1026 = vpop.f32.mrf.mxu0
    %v1027 = vadd.f32 0.0, %v1026
    %v1028 = vpop.f32.mrf.mxu0
    %1029 = vmatprep.mubr.f32.mxu0 0.0
    %1030 = vmatmul.mubr.f32.gmra.mxu0 %v902
    %v1031 = vpop.f32.mrf.mxu0
    %v1032 = vadd.f32 0.0, %v1031
    %v1033 = vpop.f32.mrf.mxu0
    %1034 = vmatprep.mubr.f32.mxu0 0.0
    %1035 = vmatmul.mubr.f32.gmra.mxu0 %v905
    %v1036 = vpop.f32.mrf.mxu0
    %v1037 = vadd.f32 0.0, %v1036
    %v1038 = vpop.f32.mrf.mxu0
    %1039 = vmatprep.mubr.f32.mxu0 0.0
    %1040 = vmatmul.mubr.f32.gmra.mxu0 %v908
    %v1041 = vpop.f32.mrf.mxu0
    %v1042 = vadd.f32 0.0, %v1041
    %v1043 = vpop.f32.mrf.mxu0
    %1044 = vmatprep.mubr.f32.mxu0 0.0
    %1045 = vmatmul.mubr.f32.gmra.mxu0 %v911
    %v1046 = vpop.f32.mrf.mxu0
    %v1047 = vadd.f32 0.0, %v1046
    %v1048 = vpop.f32.mrf.mxu0
    %1049 = vmatprep.mubr.f32.mxu0 0.0
    %1050 = vmatmul.mubr.f32.gmra.mxu0 %v914
    %v1051 = vpop.f32.mrf.mxu0
    %v1052 = vadd.f32 0.0, %v1051
    %v1053 = vpop.f32.mrf.mxu0
    %1054 = vmatprep.mubr.f32.mxu0 0.0
    %1055 = vmatmul.mubr.f32.gmra.mxu0 %v917
    %v1056 = vpop.f32.mrf.mxu0
    %v1057 = vadd.f32 0.0, %v1056
    %v1058 = vpop.f32.mrf.mxu0
    %1059 = vmatprep.mubr.f32.mxu0 0.0
    %1060 = vmatmul.mubr.f32.gmra.mxu0 %v920
    %v1061 = vpop.f32.mrf.mxu0
    %v1062 = vadd.f32 0.0, %v1061
    %v1063 = vpop.f32.mrf.mxu0
    %1064 = vmatprep.mubr.f32.mxu0 0.0
    %1065 = vmatmul.mubr.f32.gmra.mxu0 %v923
    %v1066 = vpop.f32.mrf.mxu0
    %v1067 = vadd.f32 0.0, %v1066
    %v1068 = vpop.f32.mrf.mxu0
    %1069 = vdwg.mxu0
    %v1070 = vadd.f32 %v763, %v992
    %v1071 = vadd.f32 %v768, %v997
    %v1072 = vadd.f32 %v773, %v1002
    %v1073 = vadd.f32 %v778, %v1007
    %v1074 = vadd.f32 %v783, %v1012
    %v1075 = vadd.f32 %v788, %v1017
    %v1076 = vadd.f32 %v793, %v1022
    %v1077 = vadd.f32 %v798, %v1027
    %v1078 = vadd.f32 %v803, %v1032
    %v1079 = vadd.f32 %v808, %v1037
    %v1080 = vadd.f32 %v813, %v1042
    %v1081 = vadd.f32 %v818, %v1047
    %v1082 = vadd.f32 %v823, %v1052
    %v1083 = vadd.f32 %v828, %v1057
    %v1084 = vadd.f32 %v833, %v1062
    %v1085 = vadd.f32 %v838, %v1067
    %v1086 = vrot.slane %v336, 3
    %v1087 = vrot.slane %v341, 3
    %v1088 = vrot.slane %v346, 3
    %v1089 = vrot.slane %v351, 3
    %v1090 = vrot.slane %v356, 3
    %v1091 = vrot.slane %v361, 3
    %v1092 = vrot.slane %v366, 3
    %v1093 = vrot.slane %v371, 3
    %v1094 = vrot.slane %v376, 3
    %v1095 = vrot.slane %v381, 3
    %v1096 = vrot.slane %v386, 3
    %v1097 = vrot.slane %v391, 3
    %v1098 = vrot.slane %v396, 3
    %v1099 = vrot.slane %v401, 3
    %v1100 = vrot.slane %v406, 3
    %v1101 = vrot.slane %v411, 3
    %vm1102 = vcmp.lt.s32.totalorder %v433, 5
    %v1103 = vsel %vm1102, %v1100, %v1101
    %v1104 = vsel %vm1102, %v1099, %v1100
    %v1105 = vsel %vm1102, %v1098, %v1099
    %v1106 = vsel %vm1102, %v1097, %v1098
    %v1107 = vsel %vm1102, %v1096, %v1097
    %v1108 = vsel %vm1102, %v1095, %v1096
    %v1109 = vsel %vm1102, %v1094, %v1095
    %v1110 = vsel %vm1102, %v1093, %v1094
    %v1111 = vsel %vm1102, %v1092, %v1093
    %v1112 = vsel %vm1102, %v1091, %v1092
    %v1113 = vsel %vm1102, %v1090, %v1091
    %v1114 = vsel %vm1102, %v1089, %v1090
    %v1115 = vsel %vm1102, %v1088, %v1089
    %v1116 = vsel %vm1102, %v1087, %v1088
    %v1117 = vsel %vm1102, %v1086, %v1087
    %v1118 = vsel %vm1102, %v1101, %v1086
    %s1119 = scalar_lea.vmem [#allocation2], 48
    %v1120 = vld [vmem:[%s1119] sm:$0xff]
    %v1121 = vld [vmem:[%s1119 + $0x8] sm:$0xff]
    %v1123 = vsel %vm454, %v1117, 0
    %v1126 = vsel %vm454, %v1116, 0
    %v1129 = vsel %vm454, %v1115, 0
    %v1132 = vsel %vm454, %v1114, 0
    %v1135 = vsel %vm454, %v1113, 0
    %v1138 = vsel %vm454, %v1112, 0
    %v1141 = vsel %vm454, %v1111, 0
    %v1144 = vsel %vm454, %v1110, 0
    %v1147 = vsel %vm454, %v1109, 0
    %v1150 = vsel %vm454, %v1108, 0
    %v1153 = vsel %vm454, %v1107, 0
    %v1156 = vsel %vm454, %v1106, 0
    %v1159 = vsel %vm454, %v1105, 0
    %v1162 = vsel %vm454, %v1104, 0
    %v1165 = vsel %vm454, %v1103, 0
    %v1168 = vsel %vm454, %v1118, 0
    %1170 = vmatprep.subr.mxu0 0.0
    %1171 = vmatpush1.msra.mxu0 0.0
    %1172 = vmatprep.subr.mxu0 0.0
    %1173 = vmatpush1.msra.mxu0 0.0
    %1174 = vmatprep.subr.mxu0 0.0
    %1175 = vmatpush1.msra.mxu0 0.0
    %1176 = vmatprep.subr.mxu0 0.0
    %1177 = vmatpush1.msra.mxu0 0.0
    %1178 = vmatprep.subr.mxu0 0.0
    %1179 = vmatpush1.msra.mxu0 0.0
    %1180 = vmatprep.subr.mxu0 0.0
    %1181 = vmatpush1.msra.mxu0 0.0
    %1182 = vmatprep.subr.mxu0 0.0
    %1183 = vmatpush1.msra.mxu0 0.0
    %1184 = vmatprep.subr.mxu0 0.0
    %1185 = vmatpush1.msra.mxu0 0.0
    %1186 = vmatprep.subr.mxu0 0.0
    %1187 = vmatpush1.msra.mxu0 0.0
    %1188 = vmatprep.subr.mxu0 0.0
    %1189 = vmatpush1.msra.mxu0 0.0
    %1190 = vmatprep.subr.mxu0 0.0
    %1191 = vmatpush1.msra.mxu0 0.0
    %1192 = vmatprep.subr.mxu0 0.0
    %1193 = vmatpush1.msra.mxu0 0.0
    %1194 = vmatprep.subr.mxu0 0.0
    %1195 = vmatpush1.msra.mxu0 0.0
    %1196 = vmatprep.subr.mxu0 0.0
    %1197 = vmatpush1.msra.mxu0 0.0
    %1198 = vmatprep.subr.mxu0 0.0
    %1199 = vmatpush1.msra.mxu0 %v1121
    %1200 = vmatprep.subr.mxu0 0.0
    %1201 = vmatpush1.msra.mxu0 %v1120
    %1202 = vmatprep.subr.mxu0 0.0
    %1203 = vmatpush2.msra.mxu0 0.0
    %1204 = vmatprep.subr.mxu0 0.0
    %1205 = vmatpush2.msra.mxu0 0.0
    %1206 = vmatprep.subr.mxu0 0.0
    %1207 = vmatpush2.msra.mxu0 0.0
    %1208 = vmatprep.subr.mxu0 0.0
    %1209 = vmatpush2.msra.mxu0 0.0
    %1210 = vmatprep.subr.mxu0 0.0
    %1211 = vmatpush2.msra.mxu0 0.0
    %1212 = vmatprep.subr.mxu0 0.0
    %1213 = vmatpush2.msra.mxu0 0.0
    %1214 = vmatprep.subr.mxu0 0.0
    %1215 = vmatpush2.msra.mxu0 0.0
    %1216 = vmatprep.subr.mxu0 0.0
    %1217 = vmatpush2.msra.mxu0 0.0
    %1218 = vmatprep.subr.mxu0 0.0
    %1219 = vmatpush2.msra.mxu0 0.0
    %1220 = vmatprep.subr.mxu0 0.0
    %1221 = vmatpush2.msra.mxu0 0.0
    %1222 = vmatprep.subr.mxu0 0.0
    %1223 = vmatpush2.msra.mxu0 0.0
    %1224 = vmatprep.subr.mxu0 0.0
    %1225 = vmatpush2.msra.mxu0 0.0
    %1226 = vmatprep.subr.mxu0 0.0
    %1227 = vmatpush2.msra.mxu0 0.0
    %1228 = vmatprep.subr.mxu0 0.0
    %1229 = vmatpush2.msra.mxu0 0.0
    %1230 = vmatprep.subr.mxu0 0.0
    %1231 = vmatpush2.msra.mxu0 0.0
    %1232 = vmatprep.subr.mxu0 0.0
    %1233 = vmatpush2.msra.mxu0 0.0
    %1234 = vmatprep.mubr.f32.mxu0 0.0
    %1235 = vmatmul.mubr.f32.gmra.mxu0 %v1123
    %v1236 = vpop.f32.mrf.mxu0
    %v1237 = vadd.f32 0.0, %v1236
    %v1238 = vpop.f32.mrf.mxu0
    %1239 = vmatprep.mubr.f32.mxu0 0.0
    %1240 = vmatmul.mubr.f32.gmra.mxu0 %v1126
    %v1241 = vpop.f32.mrf.mxu0
    %v1242 = vadd.f32 0.0, %v1241
    %v1243 = vpop.f32.mrf.mxu0
    %1244 = vmatprep.mubr.f32.mxu0 0.0
    %1245 = vmatmul.mubr.f32.gmra.mxu0 %v1129
    %v1246 = vpop.f32.mrf.mxu0
    %v1247 = vadd.f32 0.0, %v1246
    %v1248 = vpop.f32.mrf.mxu0
    %1249 = vmatprep.mubr.f32.mxu0 0.0
    %1250 = vmatmul.mubr.f32.gmra.mxu0 %v1132
    %v1251 = vpop.f32.mrf.mxu0
    %v1252 = vadd.f32 0.0, %v1251
    %v1253 = vpop.f32.mrf.mxu0
    %1254 = vmatprep.mubr.f32.mxu0 0.0
    %1255 = vmatmul.mubr.f32.gmra.mxu0 %v1135
    %v1256 = vpop.f32.mrf.mxu0
    %v1257 = vadd.f32 0.0, %v1256
    %v1258 = vpop.f32.mrf.mxu0
    %1259 = vmatprep.mubr.f32.mxu0 0.0
    %1260 = vmatmul.mubr.f32.gmra.mxu0 %v1138
    %v1261 = vpop.f32.mrf.mxu0
    %v1262 = vadd.f32 0.0, %v1261
    %v1263 = vpop.f32.mrf.mxu0
    %1264 = vmatprep.mubr.f32.mxu0 0.0
    %1265 = vmatmul.mubr.f32.gmra.mxu0 %v1141
    %v1266 = vpop.f32.mrf.mxu0
    %v1267 = vadd.f32 0.0, %v1266
    %v1268 = vpop.f32.mrf.mxu0
    %1269 = vmatprep.mubr.f32.mxu0 0.0
    %1270 = vmatmul.mubr.f32.gmra.mxu0 %v1144
    %v1271 = vpop.f32.mrf.mxu0
    %v1272 = vadd.f32 0.0, %v1271
    %v1273 = vpop.f32.mrf.mxu0
    %1274 = vmatprep.mubr.f32.mxu0 0.0
    %1275 = vmatmul.mubr.f32.gmra.mxu0 %v1147
    %v1276 = vpop.f32.mrf.mxu0
    %v1277 = vadd.f32 0.0, %v1276
    %v1278 = vpop.f32.mrf.mxu0
    %1279 = vmatprep.mubr.f32.mxu0 0.0
    %1280 = vmatmul.mubr.f32.gmra.mxu0 %v1150
    %v1281 = vpop.f32.mrf.mxu0
    %v1282 = vadd.f32 0.0, %v1281
    %v1283 = vpop.f32.mrf.mxu0
    %1284 = vmatprep.mubr.f32.mxu0 0.0
    %1285 = vmatmul.mubr.f32.gmra.mxu0 %v1153
    %v1286 = vpop.f32.mrf.mxu0
    %v1287 = vadd.f32 0.0, %v1286
    %v1288 = vpop.f32.mrf.mxu0
    %1289 = vmatprep.mubr.f32.mxu0 0.0
    %1290 = vmatmul.mubr.f32.gmra.mxu0 %v1156
    %v1291 = vpop.f32.mrf.mxu0
    %v1292 = vadd.f32 0.0, %v1291
    %v1293 = vpop.f32.mrf.mxu0
    %1294 = vmatprep.mubr.f32.mxu0 0.0
    %1295 = vmatmul.mubr.f32.gmra.mxu0 %v1159
    %v1296 = vpop.f32.mrf.mxu0
    %v1297 = vadd.f32 0.0, %v1296
    %v1298 = vpop.f32.mrf.mxu0
    %1299 = vmatprep.mubr.f32.mxu0 0.0
    %1300 = vmatmul.mubr.f32.gmra.mxu0 %v1162
    %v1301 = vpop.f32.mrf.mxu0
    %v1302 = vadd.f32 0.0, %v1301
    %v1303 = vpop.f32.mrf.mxu0
    %1304 = vmatprep.mubr.f32.mxu0 0.0
    %1305 = vmatmul.mubr.f32.gmra.mxu0 %v1165
    %v1306 = vpop.f32.mrf.mxu0
    %v1307 = vadd.f32 0.0, %v1306
    %v1308 = vpop.f32.mrf.mxu0
    %1309 = vmatprep.mubr.f32.mxu0 0.0
    %1310 = vmatmul.mubr.f32.gmra.mxu0 %v1168
    %v1311 = vpop.f32.mrf.mxu0
    %v1312 = vadd.f32 0.0, %v1311
    %v1313 = vpop.f32.mrf.mxu0
    %1314 = vdwg.mxu0
    %v1315 = vadd.f32 %v1070, %v1237
    %v1316 = vadd.f32 %v1071, %v1242
    %v1317 = vadd.f32 %v1072, %v1247
    %v1318 = vadd.f32 %v1073, %v1252
    %v1319 = vadd.f32 %v1074, %v1257
    %v1320 = vadd.f32 %v1075, %v1262
    %v1321 = vadd.f32 %v1076, %v1267
    %v1322 = vadd.f32 %v1077, %v1272
    %v1323 = vadd.f32 %v1078, %v1277
    %v1324 = vadd.f32 %v1079, %v1282
    %v1325 = vadd.f32 %v1080, %v1287
    %v1326 = vadd.f32 %v1081, %v1292
    %v1327 = vadd.f32 %v1082, %v1297
    %v1328 = vadd.f32 %v1083, %v1302
    %v1329 = vadd.f32 %v1084, %v1307
    %v1330 = vadd.f32 %v1085, %v1312
    %v1331 = vld [vmem:[%s3] sm:$0x1]
    %v1333 = vlaneseq
    %v1334 = vshrl.u32 %v1333, 7
    %v1335 = vsub.s32 0, %v1334
    %v1336 = vrot.slane %v1331, %v1335
    %v1338 = vadd.f32 %v1315, %v1336
    %v1339 = vadd.f32 %v1316, %v1336
    %v1340 = vadd.f32 %v1317, %v1336
    %v1341 = vadd.f32 %v1318, %v1336
    %v1342 = vadd.f32 %v1319, %v1336
    %v1343 = vadd.f32 %v1320, %v1336
    %v1344 = vadd.f32 %v1321, %v1336
    %v1345 = vadd.f32 %v1322, %v1336
    %v1346 = vadd.f32 %v1323, %v1336
    %v1347 = vadd.f32 %v1324, %v1336
    %v1348 = vadd.f32 %v1325, %v1336
    %v1349 = vadd.f32 %v1326, %v1336
    %v1350 = vadd.f32 %v1327, %v1336
    %v1351 = vadd.f32 %v1328, %v1336
    %v1352 = vadd.f32 %v1329, %v1336
    %v1353 = vadd.f32 %v1330, %v1336
    %v1354 = vmax.f32 %v1338, 0.0
    %v1355 = vmax.f32 %v1339, 0.0
    %v1356 = vmax.f32 %v1340, 0.0
    %v1357 = vmax.f32 %v1341, 0.0
    %v1358 = vmax.f32 %v1342, 0.0
    %v1359 = vmax.f32 %v1343, 0.0
    %v1360 = vmax.f32 %v1344, 0.0
    %v1361 = vmax.f32 %v1345, 0.0
    %v1362 = vmax.f32 %v1346, 0.0
    %v1363 = vmax.f32 %v1347, 0.0
    %v1364 = vmax.f32 %v1348, 0.0
    %v1365 = vmax.f32 %v1349, 0.0
    %v1366 = vmax.f32 %v1350, 0.0
    %v1367 = vmax.f32 %v1351, 0.0
    %v1368 = vmax.f32 %v1352, 0.0
    %v1369 = vmax.f32 %v1353, 0.0
    %v1370 = vadd.s32 %v433, 8
    %v1371 = vld [vmem:[%s4] sm:$0x1]
    %v1372 = vlaneseq
    %v1373 = vshrl.u32 %v1372, 7
    %v1374 = vsub.s32 0, %v1373
    %v1375 = vrot.slane %v1371, %v1374
    %vm1376 = vcmp.le.s32.totalorder %v433, %v1375
    %vm1377 = vcmp.le.s32.totalorder %v1370, %v1375
    %v1378 = vsel %vm1376, 1, 0
    %v1379 = vsel %vm1377, 1, 0
    %v1380 = vcvt.s32.f32 %v1378
    %v1381 = vcvt.s32.f32 %v1379
    %v1382 = vmul.f32 %v1354, %v1380
    %v1383 = vmul.f32 %v1355, %v1381
    %v1384 = vmul.f32 %v1356, %v1380
    %v1385 = vmul.f32 %v1357, %v1381
    %v1386 = vmul.f32 %v1358, %v1380
    %v1387 = vmul.f32 %v1359, %v1381
    %v1388 = vmul.f32 %v1360, %v1380
    %v1389 = vmul.f32 %v1361, %v1381
    %v1390 = vmul.f32 %v1362, %v1380
    %v1391 = vmul.f32 %v1363, %v1381
    %v1392 = vmul.f32 %v1364, %v1380
    %v1393 = vmul.f32 %v1365, %v1381
    %v1394 = vmul.f32 %v1366, %v1380
    %v1395 = vmul.f32 %v1367, %v1381
    %v1396 = vmul.f32 %v1368, %v1380
    %v1397 = vmul.f32 %v1369, %v1381
    %v1398 = vmax.f32 %v1382, %v1383
    %v1399 = vrot.slane %v1398, 4
    %v1400 = vmax.f32 %v1398, %v1399
    %v1401 = vrot.slane %v1400, 2
    %v1402 = vmax.f32 %v1400, %v1401
    %v1403 = vrot.slane %v1402, 1
    %v1404 = vmax.f32 %v1402, %v1403
    %v1405 = vmax.f32 %v1384, %v1385
    %v1406 = vrot.slane %v1405, 4
    %v1407 = vmax.f32 %v1405, %v1406
    %v1408 = vrot.slane %v1407, 2
    %v1409 = vmax.f32 %v1407, %v1408
    %v1410 = vrot.slane %v1409, 1
    %v1411 = vmax.f32 %v1409, %v1410
    %v1412 = vmax.f32 %v1386, %v1387
    %v1413 = vrot.slane %v1412, 4
    %v1414 = vmax.f32 %v1412, %v1413
    %v1415 = vrot.slane %v1414, 2
    %v1416 = vmax.f32 %v1414, %v1415
    %v1417 = vrot.slane %v1416, 1
    %v1418 = vmax.f32 %v1416, %v1417
    %v1419 = vmax.f32 %v1388, %v1389
    %v1420 = vrot.slane %v1419, 4
    %v1421 = vmax.f32 %v1419, %v1420
    %v1422 = vrot.slane %v1421, 2
    %v1423 = vmax.f32 %v1421, %v1422
    %v1424 = vrot.slane %v1423, 1
    %v1425 = vmax.f32 %v1423, %v1424
    %v1426 = vmax.f32 %v1390, %v1391
    %v1427 = vrot.slane %v1426, 4
    %v1428 = vmax.f32 %v1426, %v1427
    %v1429 = vrot.slane %v1428, 2
    %v1430 = vmax.f32 %v1428, %v1429
    %v1431 = vrot.slane %v1430, 1
    %v1432 = vmax.f32 %v1430, %v1431
    %v1433 = vmax.f32 %v1392, %v1393
    %v1434 = vrot.slane %v1433, 4
    %v1435 = vmax.f32 %v1433, %v1434
    %v1436 = vrot.slane %v1435, 2
    %v1437 = vmax.f32 %v1435, %v1436
    %v1438 = vrot.slane %v1437, 1
    %v1439 = vmax.f32 %v1437, %v1438
    %v1440 = vmax.f32 %v1394, %v1395
    %v1441 = vrot.slane %v1440, 4
    %v1442 = vmax.f32 %v1440, %v1441
    %v1443 = vrot.slane %v1442, 2
    %v1444 = vmax.f32 %v1442, %v1443
    %v1445 = vrot.slane %v1444, 1
    %v1446 = vmax.f32 %v1444, %v1445
    %v1447 = vmax.f32 %v1396, %v1397
    %v1448 = vrot.slane %v1447, 4
    %v1449 = vmax.f32 %v1447, %v1448
    %v1450 = vrot.slane %v1449, 2
    %v1451 = vmax.f32 %v1449, %v1450
    %v1452 = vrot.slane %v1451, 1
    %v1453 = vmax.f32 %v1451, %v1452
    %v1454 = vld [vmem:[#allocation5] sm:$0xff]
    %v1455 = vld [vmem:[#allocation5 + $0x8] sm:$0xff]
    %v1456 = vld [vmem:[#allocation5 + $0x10] sm:$0xff]
    %v1457 = vld [vmem:[#allocation5 + $0x18] sm:$0xff]
    %v1458 = vld [vmem:[#allocation5 + $0x20] sm:$0xff]
    %v1459 = vld [vmem:[#allocation5 + $0x28] sm:$0xff]
    %v1460 = vld [vmem:[#allocation5 + $0x30] sm:$0xff]
    %v1461 = vld [vmem:[#allocation5 + $0x38] sm:$0xff]
    %v1462 = vld [vmem:[#allocation5 + $0x40] sm:$0xff]
    %v1463 = vld [vmem:[#allocation5 + $0x48] sm:$0xff]
    %v1464 = vld [vmem:[#allocation5 + $0x50] sm:$0xff]
    %v1465 = vld [vmem:[#allocation5 + $0x58] sm:$0xff]
    %v1466 = vld [vmem:[#allocation5 + $0x60] sm:$0xff]
    %v1467 = vld [vmem:[#allocation5 + $0x68] sm:$0xff]
    %v1468 = vld [vmem:[#allocation5 + $0x70] sm:$0xff]
    %v1469 = vld [vmem:[#allocation5 + $0x78] sm:$0xff]
    %v1470 = vld [vmem:[%s6] sm:$0x1]
    %v1472 = vlaneseq
    %v1473 = vshrl.u32 %v1472, 7
    %v1474 = vsub.s32 0, %v1473
    %v1475 = vrot.slane %v1470, %v1474
    %vm1485 = vcmask 1041409
    %v1486 = vsel %vm1485, %v1411, %v1404
    %vm1487 = vcmask 1042434
    %v1488 = vsel %vm1487, %v1418, %v1486
    %vm1489 = vcmask 1043459
    %v1490 = vsel %vm1489, %v1425, %v1488
    %vm1491 = vcmask 1044484
    %v1492 = vsel %vm1491, %v1432, %v1490
    %vm1493 = vcmask 1045509
    %v1494 = vsel %vm1493, %v1439, %v1492
    %vm1495 = vcmask 1046534
    %v1496 = vsel %vm1495, %v1446, %v1494
    %vm1497 = vcmask 1047559
    %v1498 = vsel %vm1497, %v1453, %v1496
    %1500 = vmatprep.subr.mxu0 0.0
    %1501 = vmatpush1.msra.mxu0 %v1469
    %1502 = vmatprep.subr.mxu0 0.0
    %1503 = vmatpush1.msra.mxu0 %v1468
    %1504 = vmatprep.subr.mxu0 0.0
    %1505 = vmatpush1.msra.mxu0 %v1467
    %1506 = vmatprep.subr.mxu0 0.0
    %1507 = vmatpush1.msra.mxu0 %v1466
    %1508 = vmatprep.subr.mxu0 0.0
    %1509 = vmatpush1.msra.mxu0 %v1465
    %1510 = vmatprep.subr.mxu0 0.0
    %1511 = vmatpush1.msra.mxu0 %v1464
    %1512 = vmatprep.subr.mxu0 0.0
    %1513 = vmatpush1.msra.mxu0 %v1463
    %1514 = vmatprep.subr.mxu0 0.0
    %1515 = vmatpush1.msra.mxu0 %v1462
    %1516 = vmatprep.subr.mxu0 0.0
    %1517 = vmatpush1.msra.mxu0 %v1461
    %1518 = vmatprep.subr.mxu0 0.0
    %1519 = vmatpush1.msra.mxu0 %v1460
    %1520 = vmatprep.subr.mxu0 0.0
    %1521 = vmatpush1.msra.mxu0 %v1459
    %1522 = vmatprep.subr.mxu0 0.0
    %1523 = vmatpush1.msra.mxu0 %v1458
    %1524 = vmatprep.subr.mxu0 0.0
    %1525 = vmatpush1.msra.mxu0 %v1457
    %1526 = vmatprep.subr.mxu0 0.0
    %1527 = vmatpush1.msra.mxu0 %v1456
    %1528 = vmatprep.subr.mxu0 0.0
    %1529 = vmatpush1.msra.mxu0 %v1455
    %1530 = vmatprep.subr.mxu0 0.0
    %1531 = vmatpush1.msra.mxu0 %v1454
    %1532 = vmatprep.subr.mxu0 0.0
    %1533 = vmatpush2.msra.mxu0 0.0
    %1534 = vmatprep.subr.mxu0 0.0
    %1535 = vmatpush2.msra.mxu0 0.0
    %1536 = vmatprep.subr.mxu0 0.0
    %1537 = vmatpush2.msra.mxu0 0.0
    %1538 = vmatprep.subr.mxu0 0.0
    %1539 = vmatpush2.msra.mxu0 0.0
    %1540 = vmatprep.subr.mxu0 0.0
    %1541 = vmatpush2.msra.mxu0 0.0
    %1542 = vmatprep.subr.mxu0 0.0
    %1543 = vmatpush2.msra.mxu0 0.0
    %1544 = vmatprep.subr.mxu0 0.0
    %1545 = vmatpush2.msra.mxu0 0.0
    %1546 = vmatprep.subr.mxu0 0.0
    %1547 = vmatpush2.msra.mxu0 0.0
    %1548 = vmatprep.subr.mxu0 0.0
    %1549 = vmatpush2.msra.mxu0 0.0
    %1550 = vmatprep.subr.mxu0 0.0
    %1551 = vmatpush2.msra.mxu0 0.0
    %1552 = vmatprep.subr.mxu0 0.0
    %1553 = vmatpush2.msra.mxu0 0.0
    %1554 = vmatprep.subr.mxu0 0.0
    %1555 = vmatpush2.msra.mxu0 0.0
    %1556 = vmatprep.subr.mxu0 0.0
    %1557 = vmatpush2.msra.mxu0 0.0
    %1558 = vmatprep.subr.mxu0 0.0
    %1559 = vmatpush2.msra.mxu0 0.0
    %1560 = vmatprep.subr.mxu0 0.0
    %1561 = vmatpush2.msra.mxu0 0.0
    %1562 = vmatprep.subr.mxu0 0.0
    %1563 = vmatpush2.msra.mxu0 0.0
    %1564 = vmatprep.mubr.f32.mxu0 0.0
    %1565 = vmatmul.mubr.f32.gmra.mxu0 %v1498
    %v1566 = vpop.f32.mrf.mxu0
    %v1567 = vadd.f32 %v1475, %v1566
    %v1568 = vpop.f32.mrf.mxu0
    %1569 = vdwg.mxu0
    %v1570 = vmax.f32 %v1567, 0.0
    %1571 = vst [vmem:[#allocation9] sm:$0xff] %v1570
    %v1572 = vld [vmem:[#allocation7] sm:$0xff]
    %v1573 = vld [vmem:[#allocation7 + $0x8] sm:$0xff]
    %v1574 = vld [vmem:[#allocation7 + $0x10] sm:$0xff]
    %v1575 = vld [vmem:[#allocation7 + $0x18] sm:$0xff]
    %v1576 = vld [vmem:[#allocation7 + $0x20] sm:$0xff]
    %v1577 = vld [vmem:[#allocation7 + $0x28] sm:$0xff]
    %v1578 = vld [vmem:[#allocation7 + $0x30] sm:$0xff]
    %v1579 = vld [vmem:[#allocation7 + $0x38] sm:$0xff]
    %v1580 = vld [vmem:[#allocation7 + $0x40] sm:$0xff]
    %v1581 = vld [vmem:[#allocation7 + $0x48] sm:$0xff]
    %v1582 = vld [vmem:[#allocation7 + $0x50] sm:$0xff]
    %v1583 = vld [vmem:[#allocation7 + $0x58] sm:$0xff]
    %v1584 = vld [vmem:[#allocation7 + $0x60] sm:$0xff]
    %v1585 = vld [vmem:[#allocation7 + $0x68] sm:$0xff]
    %v1586 = vld [vmem:[#allocation7 + $0x70] sm:$0xff]
    %v1587 = vld [vmem:[#allocation7 + $0x78] sm:$0xff]
    %v1588 = vld [vmem:[%s8] sm:$0x1]
    %v1590 = vlaneseq
    %v1591 = vshrl.u32 %v1590, 7
    %v1592 = vsub.s32 0, %v1591
    %v1593 = vrot.slane %v1588, %v1592
    %1595 = vmatprep.subr.mxu0 0.0
    %1596 = vmatpush1.msra.mxu0 %v1587
    %1597 = vmatprep.subr.mxu0 0.0
    %1598 = vmatpush1.msra.mxu0 %v1586
    %1599 = vmatprep.subr.mxu0 0.0
    %1600 = vmatpush1.msra.mxu0 %v1585
    %1601 = vmatprep.subr.mxu0 0.0
    %1602 = vmatpush1.msra.mxu0 %v1584
    %1603 = vmatprep.subr.mxu0 0.0
    %1604 = vmatpush1.msra.mxu0 %v1583
    %1605 = vmatprep.subr.mxu0 0.0
    %1606 = vmatpush1.msra.mxu0 %v1582
    %1607 = vmatprep.subr.mxu0 0.0
    %1608 = vmatpush1.msra.mxu0 %v1581
    %1609 = vmatprep.subr.mxu0 0.0
    %1610 = vmatpush1.msra.mxu0 %v1580
    %1611 = vmatprep.subr.mxu0 0.0
    %1612 = vmatpush1.msra.mxu0 %v1579
    %1613 = vmatprep.subr.mxu0 0.0
    %1614 = vmatpush1.msra.mxu0 %v1578
    %1615 = vmatprep.subr.mxu0 0.0
    %1616 = vmatpush1.msra.mxu0 %v1577
    %1617 = vmatprep.subr.mxu0 0.0
    %1618 = vmatpush1.msra.mxu0 %v1576
    %1619 = vmatprep.subr.mxu0 0.0
    %1620 = vmatpush1.msra.mxu0 %v1575
    %1621 = vmatprep.subr.mxu0 0.0
    %1622 = vmatpush1.msra.mxu0 %v1574
    %1623 = vmatprep.subr.mxu0 0.0
    %1624 = vmatpush1.msra.mxu0 %v1573
    %1625 = vmatprep.subr.mxu0 0.0
    %1626 = vmatpush1.msra.mxu0 %v1572
    %1627 = vmatprep.subr.mxu0 0.0
    %1628 = vmatpush2.msra.mxu0 0.0
    %1629 = vmatprep.subr.mxu0 0.0
    %1630 = vmatpush2.msra.mxu0 0.0
    %1631 = vmatprep.subr.mxu0 0.0
    %1632 = vmatpush2.msra.mxu0 0.0
    %1633 = vmatprep.subr.mxu0 0.0
    %1634 = vmatpush2.msra.mxu0 0.0
    %1635 = vmatprep.subr.mxu0 0.0
    %1636 = vmatpush2.msra.mxu0 0.0
    %1637 = vmatprep.subr.mxu0 0.0
    %1638 = vmatpush2.msra.mxu0 0.0
    %1639 = vmatprep.subr.mxu0 0.0
    %1640 = vmatpush2.msra.mxu0 0.0
    %1641 = vmatprep.subr.mxu0 0.0
    %1642 = vmatpush2.msra.mxu0 0.0
    %1643 = vmatprep.subr.mxu0 0.0
    %1644 = vmatpush2.msra.mxu0 0.0
    %1645 = vmatprep.subr.mxu0 0.0
    %1646 = vmatpush2.msra.mxu0 0.0
    %1647 = vmatprep.subr.mxu0 0.0
    %1648 = vmatpush2.msra.mxu0 0.0
    %1649 = vmatprep.subr.mxu0 0.0
    %1650 = vmatpush2.msra.mxu0 0.0
    %1651 = vmatprep.subr.mxu0 0.0
    %1652 = vmatpush2.msra.mxu0 0.0
    %1653 = vmatprep.subr.mxu0 0.0
    %1654 = vmatpush2.msra.mxu0 0.0
    %1655 = vmatprep.subr.mxu0 0.0
    %1656 = vmatpush2.msra.mxu0 0.0
    %1657 = vmatprep.subr.mxu0 0.0
    %1658 = vmatpush2.msra.mxu0 0.0
    %1659 = vmatprep.mubr.f32.mxu0 0.0
    %1660 = vmatmul.mubr.f32.gmra.mxu0 %v1570
    %v1661 = vpop.f32.mrf.mxu0
    %v1662 = vadd.f32 %v1593, %v1661
    %v1663 = vpop.f32.mrf.mxu0
    %1664 = vdwg.mxu0
    %1665 = vst [vmem:[#allocation8] sm:$0xff] %v1662
    // Predicated region
    $region50: #{tpu_custom_call.1} parent=1 // pred_check
      _
    $region51: #{tpu_custom_call.1} parent=1 // pred_check_branch
      %1667 = sbr.rel (0) target = $region53
    $region52: #{tpu_custom_call.1} parent=1 // pred_region
      %s1669 = ssub.s32 128, 128
      %1670 = vsyncadd [#allocation4], %s1669
      %s1672 = sshll.u32 [#allocation8], 4
      %s1673 = int_to_ptr.vmem [resolvable:$true] %s1672
      %1675 = dma.vmem_to_hbm [thread:$0]  %s1673, 128, %s9, [#allocation4]
    $region53: #{tpu_custom_call.1} parent=1 // pred_fallthru
      _
    // Predicated region
    $region54: #{tpu_custom_call.1} parent=1 // pred_check
      _
    $region55: #{tpu_custom_call.1} parent=1 // pred_check_branch
      %1677 = sbr.rel (0) target = $region57
    $region56: #{tpu_custom_call.1} parent=1 // pred_region
      %s1679 = ssub.s32 128, 128
      %1680 = vsyncadd [#allocation10], %s1679
      %s1682 = sshll.u32 [#allocation9], 4
      %s1683 = int_to_ptr.vmem [resolvable:$true] %s1682
      %1685 = dma.vmem_to_hbm [thread:$0]  %s1683, 128, %s10, [#allocation10]
    $region57: #{tpu_custom_call.1} parent=1 // pred_fallthru
      _
    // Predicated region
    $region58: #{tpu_custom_call.1} parent=1 // pred_check
      _
    $region59: #{tpu_custom_call.1} parent=1 // pred_check_branch
      %1687 = sbr.rel (0) target = $region61
    $region60: #{tpu_custom_call.1} parent=1 // pred_region
      %1688 = dma.done [#allocation4], 128
    $region61: #{tpu_custom_call.1} parent=1 // pred_fallthru
      _
    // Predicated region
    $region62: #{tpu_custom_call.1} parent=1 // pred_check
      _
    $region63: #{tpu_custom_call.1} parent=1 // pred_check_branch
      %1690 = sbr.rel (0) target = $region65
    $region64: #{tpu_custom_call.1} parent=1 // pred_region
      %1691 = dma.done [#allocation10], 128
    $region65: #{tpu_custom_call.1} parent=1 // pred_fallthru
      _
    %1692 = vsyncpa [#allocation3], 1
    %1693 = vsyncpa [#allocation6], 1
    %1694 = vsyncpa [#allocation4], 1
    %1695 = vsyncpa [#allocation10], 1

</llo_original>
